<compile_context>
chip_gen: v5e
topology: v5e:2x2
jax: 0.10.0
libtpu: 0.0.40
codegen_flags: <defaults>
</compile_context>

<pallas_src>
import math
import functools
import numpy as np
import jax
import jax.numpy as jnp
from jax import lax
from jax.experimental import pallas as pl
from jax.experimental.pallas import tpu as pltpu

WINDOW_SIZE = 11
SIGMA = 1.5
C1 = 0.01 ** 2
C2 = 0.03 ** 2


def _gaussian_1d(window_size=WINDOW_SIZE, sigma=SIGMA):
    g = np.array(
        [math.exp(-((x - window_size // 2) ** 2) / float(2 * sigma ** 2))
         for x in range(window_size)],
        dtype=np.float32,
    )
    return g / g.sum()  # matches create_window()'s 1D Gaussian


def _band_matrix(n, window_size=WINDOW_SIZE, sigma=SIGMA):
    """(n, n) banded matrix M such that (M @ x) applies the zero-padded 1-D
    Gaussian convolution along the leading axis of x (padding folded in by
    clipping the band at the edges)."""
    g = _gaussian_1d(window_size, sigma)
    pad = window_size // 2
    m = np.zeros((n, n), np.float32)
    for a in range(n):
        lo = max(0, a - pad)
        hi = min(n, a + pad + 1)
        m[a, lo:hi] = g[lo - a + pad:hi - a + pad]
    return m


def _hi_lo(m_np):
    """Split an f32 matrix into hi + lo bf16 parts (hi + lo ~== f32 exact)."""
    m = jnp.asarray(m_np, jnp.float32)
    hi = m.astype(jnp.bfloat16)
    lo = (m - hi.astype(jnp.float32)).astype(jnp.bfloat16)
    return hi, lo


def _ssim_kernel(x1_ref, x2_ref, grh_ref, grl_ref, gch_ref, gcl_ref, out_ref,
                 *, B, H, W):
    """One grid step = B unpadded (H, W) image pairs."""
    x1 = x1_ref[...].astype(jnp.float32)       # (B, H, W)
    x2 = x2_ref[...].astype(jnp.float32)

    gc_hi = gch_ref[...]                       # (W, W) bf16
    gc_lo = gcl_ref[...]
    gr_hi = jnp.broadcast_to(grh_ref[...], (B, H, H))   # (B, H, H) bf16
    gr_lo = jnp.broadcast_to(grl_ref[...], (B, H, H))

    def colpass(v):
        # Fused 2-D MXU matmul over all B images; hi+lo weight passes with
        # f32 accumulation keep the Gaussian weights ~f32-exact.
        v16 = v.astype(jnp.bfloat16).reshape(B * H, W)
        r = (jnp.dot(v16, gc_hi, preferred_element_type=jnp.float32) +
             jnp.dot(v16, gc_lo, preferred_element_type=jnp.float32))
        return r.reshape(B, H, W)

    def rowpass(t):
        # Single batched matmul per weight part (no per-image Python unroll).
        t16 = t.astype(jnp.bfloat16)           # (B, H, W)
        return (jnp.einsum('bhk,bkw->bhw', gr_hi, t16,
                           preferred_element_type=jnp.float32) +
                jnp.einsum('bhk,bkw->bhw', gr_lo, t16,
                           preferred_element_type=jnp.float32))

    def conv(v):
        return rowpass(colpass(v))

    mu1 = conv(x1)
    mu2 = conv(x2)
    e11 = conv(x1 * x1)
    e22 = conv(x2 * x2)
    e12 = conv(x1 * x2)

    mu1_sq = mu1 * mu1
    mu2_sq = mu2 * mu2
    mu1_mu2 = mu1 * mu2
    sigma1_sq = e11 - mu1_sq
    sigma2_sq = e22 - mu2_sq
    sigma12 = e12 - mu1_mu2

    num = (2.0 * mu1_mu2 + C1) * (2.0 * sigma12 + C2)
    den = (mu1_sq + mu2_sq + C1) * (sigma1_sq + sigma2_sq + C2)
    inv = pl.reciprocal(den, approx=True)      # EUP slot instead of divide
    inv = inv * (2.0 - den * inv)              # 1 Newton step; VPU has slack
    ssim_map = num * inv                       # (B, H, W)

    # Per-image scalar reduction; one tiny store per grid step.
    out_ref[0, :, :] = jnp.sum(jnp.sum(ssim_map, axis=2), axis=1,
                               keepdims=True)  # (B, 1)


def ssim_pallas(img1, img2, window_size=WINDOW_SIZE, size_average=True,
                max_block_images=64, vmem_budget_bytes=24 << 20):
    """SSIM matching the PyTorch SSIM module's forward."""
    assert img1.shape == img2.shape
    N, C, H, W = img1.shape
    NC = N * C

    # ~16 live f32 (B,H,W) temporaries + bf16 matmul operands per image;
    # budget chosen so blocks stay well inside v7x's 64 MiB VMEM.
    per_img_vmem = H * W * (16 * 4 + 6 * 2)
    b_vmem = max(1, vmem_budget_bytes // per_img_vmem)
    # ceil(NC/2) cap guarantees >= 2 grid steps so both v7x TCs get work.
    B = int(max(1, min(max_block_images, b_vmem, (NC + 1) // 2)))
    G = (NC + B - 1) // B
    NC_pad = G * B

    x1 = img1.reshape(NC, H, W)   # free reshape; no padded spatial copy
    x2 = img2.reshape(NC, H, W)
    if NC_pad > NC:               # pad with zero images; sliced off below
        pad_n = ((0, NC_pad - NC), (0, 0), (0, 0))
        x1 = jnp.pad(x1, pad_n)
        x2 = jnp.pad(x2, pad_n)
    # TODO(synk): callers that already hold bf16 images can pass them in
    # directly (halves HBM/DMA bytes, biggest win on v5e); the kernel upcasts
    # for the elementwise math and feeds bf16 to the MXU either way.

    g_row = _band_matrix(H, window_size)       # (H, H): left-multiply conv
    g_col = _band_matrix(W, window_size).T     # (W, W): right-multiply conv
    gr_hi, gr_lo = _hi_lo(g_row)
    gc_hi, gc_lo = _hi_lo(g_col)

    kernel = functools.partial(_ssim_kernel, B=B, H=H, W=W)

    sums = pl.pallas_call(
        kernel,
        out_shape=jax.ShapeDtypeStruct((G, B, 1), jnp.float32),
        grid_spec=pltpu.PrefetchScalarGridSpec(
            num_scalar_prefetch=0,
            grid=(G,),
            in_specs=[
                pl.BlockSpec((B, H, W), lambda i: (i, 0, 0)),
                pl.BlockSpec((B, H, W), lambda i: (i, 0, 0)),
                pl.BlockSpec((H, H), lambda i: (0, 0)),   # G_row hi (resident)
                pl.BlockSpec((H, H), lambda i: (0, 0)),   # G_row lo
                pl.BlockSpec((W, W), lambda i: (0, 0)),   # G_col hi
                pl.BlockSpec((W, W), lambda i: (0, 0)),   # G_col lo
            ],
            out_specs=pl.BlockSpec((1, B, 1), lambda i: (i, 0, 0)),
        ),
        compiler_params=pltpu.CompilerParams(
            dimension_semantics=("parallel",),
            vmem_limit_bytes=48 * 1024 * 1024),
    )(x1, x2, gr_hi, gr_lo, gc_hi, gc_lo)

    per_image = sums.reshape(NC_pad)[:NC]      # per-image ssim_map sums
    if size_average:
        return per_image.sum() / float(NC * H * W)
    # size_average=False: per-sample mean over (C, H, W), like
    # ssim_map.mean(1).mean(1).mean(1) in the PyTorch module.
    return per_image.reshape(N, C).sum(axis=1) / float(C * H * W)


def _ssim_reference_map(img1, img2, window_size=WINDOW_SIZE):
    """Pure-JAX reference ssim_map using lax grouped conv (mirrors PyTorch)."""
    N, C, H, W = img1.shape
    pad = window_size // 2
    g = jnp.asarray(_gaussian_1d(window_size, SIGMA), dtype=jnp.float32)
    w2d = jnp.outer(g, g)
    window = jnp.broadcast_to(w2d, (C, 1, window_size, window_size))

    def conv(x):
        return lax.conv_general_dilated(
            x, window, window_strides=(1, 1),
            padding=[(pad, pad), (pad, pad)],
            dimension_numbers=("NCHW", "OIHW", "NCHW"),
            feature_group_count=C,
            precision=lax.Precision.HIGHEST)

    mu1, mu2 = conv(img1), conv(img2)
    mu1_sq, mu2_sq, mu1_mu2 = mu1 * mu1, mu2 * mu2, mu1 * mu2
    s1 = conv(img1 * img1) - mu1_sq
    s2 = conv(img2 * img2) - mu2_sq
    s12 = conv(img1 * img2) - mu1_mu2
    return ((2 * mu1_mu2 + C1) * (2 * s12 + C2)) / (
        (mu1_sq + mu2_sq + C1) * (s1 + s2 + C2))


if __name__ == "__main__":
    key = jax.random.PRNGKey(0)
    k1, k2 = jax.random.split(key)
    N, C, H, W = 2, 4, 16, 16
    img1 = jax.random.uniform(k1, (N, C, H, W), dtype=jnp.float32)
    img2 = jax.random.uniform(k2, (N, C, H, W), dtype=jnp.float32)

    # size_average=True (module default)
    out = jax.block_until_ready(ssim_pallas(img1, img2))
    ref_map = jax.block_until_ready(_ssim_reference_map(img1, img2))
    ref = float(jnp.mean(ref_map))
    assert np.isfinite(float(out))
    np.testing.assert_allclose(float(out), ref, rtol=1e-3, atol=1e-3)

    # size_average=False (per-sample means)
    out_b = jax.block_until_ready(ssim_pallas(img1, img2, size_average=False))
    ref_b = np.asarray(jnp.mean(ref_map, axis=(1, 2, 3)))
    np.testing.assert_allclose(np.asarray(out_b), ref_b, rtol=1e-3, atol=1e-3)

    print("KERNEL_OK")
</pallas_src>

<mosaic_0001>
module attributes {stable_mosaic.version = 11 : i64} {
  func.func @_ssim_kernel(%arg0: i32, %arg1: memref<4x16x16xf32, #tpu.memory_space<vmem>>, %arg2: memref<4x16x16xf32, #tpu.memory_space<vmem>>, %arg3: memref<16x16xbf16, #tpu.memory_space<vmem>>, %arg4: memref<16x16xbf16, #tpu.memory_space<vmem>>, %arg5: memref<16x16xbf16, #tpu.memory_space<vmem>>, %arg6: memref<16x16xbf16, #tpu.memory_space<vmem>>, %arg7: memref<1x4x1xf32, #tpu.memory_space<vmem>>) attributes {dimension_semantics = [#tpu.dimension_semantics<parallel>], iteration_bounds = array<i64: 2>, scalar_prefetch = 0 : i64, scratch_operands = 0 : i64, tpu.core_type = #tpu.core_type<tc>, window_params = [{transform_indices = @transform_0, window_bounds = array<i64: 4, 16, 16>}, {transform_indices = @transform_1, window_bounds = array<i64: 4, 16, 16>}, {pipeline_mode = #tpu.pipeline_mode<synchronous>, transform_indices = @transform_2, window_bounds = array<i64: 16, 16>}, {pipeline_mode = #tpu.pipeline_mode<synchronous>, transform_indices = @transform_3, window_bounds = array<i64: 16, 16>}, {pipeline_mode = #tpu.pipeline_mode<synchronous>, transform_indices = @transform_4, window_bounds = array<i64: 16, 16>}, {pipeline_mode = #tpu.pipeline_mode<synchronous>, transform_indices = @transform_5, window_bounds = array<i64: 16, 16>}, {transform_indices = @transform_6, window_bounds = array<i64: 1, 4, 1>}]} {
    %c0 = arith.constant 0 : index
    %c0_0 = arith.constant 0 : index
    %c0_1 = arith.constant 0 : index
    %0 = vector.load %arg1[%c0, %c0_0, %c0_1] : memref<4x16x16xf32, #tpu.memory_space<vmem>>, vector<4x16x16xf32>
    %c0_2 = arith.constant 0 : index
    %c0_3 = arith.constant 0 : index
    %c0_4 = arith.constant 0 : index
    %1 = vector.load %arg2[%c0_2, %c0_3, %c0_4] : memref<4x16x16xf32, #tpu.memory_space<vmem>>, vector<4x16x16xf32>
    %c0_5 = arith.constant 0 : index
    %c0_6 = arith.constant 0 : index
    %2 = vector.load %arg5[%c0_5, %c0_6] : memref<16x16xbf16, #tpu.memory_space<vmem>>, vector<16x16xbf16>
    %c0_7 = arith.constant 0 : index
    %c0_8 = arith.constant 0 : index
    %3 = vector.load %arg6[%c0_7, %c0_8] : memref<16x16xbf16, #tpu.memory_space<vmem>>, vector<16x16xbf16>
    %c0_9 = arith.constant 0 : index
    %c0_10 = arith.constant 0 : index
    %4 = vector.load %arg3[%c0_9, %c0_10] : memref<16x16xbf16, #tpu.memory_space<vmem>>, vector<16x16xbf16>
    %5 = vector.shape_cast %4 : vector<16x16xbf16> to vector<1x16x16xbf16>
    %6 = vector.broadcast %5 : vector<1x16x16xbf16> to vector<4x16x16xbf16>
    %c0_11 = arith.constant 0 : index
    %c0_12 = arith.constant 0 : index
    %7 = vector.load %arg4[%c0_11, %c0_12] : memref<16x16xbf16, #tpu.memory_space<vmem>>, vector<16x16xbf16>
    %8 = vector.shape_cast %7 : vector<16x16xbf16> to vector<1x16x16xbf16>
    %9 = vector.broadcast %8 : vector<1x16x16xbf16> to vector<4x16x16xbf16>
    %10 = arith.truncf %0 : vector<4x16x16xf32> to vector<4x16x16xbf16>
    %11 = vector.shape_cast %10 : vector<4x16x16xbf16> to vector<64x16xbf16>
    %cst = arith.constant dense<0.000000e+00> : vector<64x16xf32>
    %12 = tpu.matmul %11, %2, %cst {dimension_numbers = #tpu.dot_dimension_numbers<[1], [0], [0], [1], [0, 0, 1, 1], [], []>} : vector<64x16xbf16>, vector<16x16xbf16>, vector<64x16xf32> -> vector<64x16xf32>
    %cst_13 = arith.constant dense<0.000000e+00> : vector<64x16xf32>
    %13 = tpu.matmul %11, %3, %cst_13 {dimension_numbers = #tpu.dot_dimension_numbers<[1], [0], [0], [1], [0, 0, 1, 1], [], []>} : vector<64x16xbf16>, vector<16x16xbf16>, vector<64x16xf32> -> vector<64x16xf32>
    %14 = arith.addf %12, %13 : vector<64x16xf32>
    %15 = vector.shape_cast %14 : vector<64x16xf32> to vector<4x16x16xf32>
    %16 = arith.truncf %15 : vector<4x16x16xf32> to vector<4x16x16xbf16>
    "tpu.trace_start"() <{level = 10 : i32, message = "bhk,bkw->bhw"}> : () -> ()
    %cst_14 = arith.constant dense<0.000000e+00> : vector<4x16x16xf32>
    %17 = tpu.matmul %6, %16, %cst_14 {dimension_numbers = #tpu.dot_dimension_numbers<[2], [1], [1], [2], [0, 0, 0, 1, 1, 2], [0], [0]>} : vector<4x16x16xbf16>, vector<4x16x16xbf16>, vector<4x16x16xf32> -> vector<4x16x16xf32>
    %cst_15 = arith.constant dense<0.000000e+00> : vector<4x16x16xf32>
    %18 = tpu.matmul %9, %16, %cst_15 {dimension_numbers = #tpu.dot_dimension_numbers<[2], [1], [1], [2], [0, 0, 0, 1, 1, 2], [0], [0]>} : vector<4x16x16xbf16>, vector<4x16x16xbf16>, vector<4x16x16xf32> -> vector<4x16x16xf32>
    "tpu.trace_stop"() : () -> ()
    %19 = arith.addf %17, %18 : vector<4x16x16xf32>
    %20 = arith.truncf %1 : vector<4x16x16xf32> to vector<4x16x16xbf16>
    %21 = vector.shape_cast %20 : vector<4x16x16xbf16> to vector<64x16xbf16>
    %cst_16 = arith.constant dense<0.000000e+00> : vector<64x16xf32>
    %22 = tpu.matmul %21, %2, %cst_16 {dimension_numbers = #tpu.dot_dimension_numbers<[1], [0], [0], [1], [0, 0, 1, 1], [], []>} : vector<64x16xbf16>, vector<16x16xbf16>, vector<64x16xf32> -> vector<64x16xf32>
    %cst_17 = arith.constant dense<0.000000e+00> : vector<64x16xf32>
    %23 = tpu.matmul %21, %3, %cst_17 {dimension_numbers = #tpu.dot_dimension_numbers<[1], [0], [0], [1], [0, 0, 1, 1], [], []>} : vector<64x16xbf16>, vector<16x16xbf16>, vector<64x16xf32> -> vector<64x16xf32>
    %24 = arith.addf %22, %23 : vector<64x16xf32>
    %25 = vector.shape_cast %24 : vector<64x16xf32> to vector<4x16x16xf32>
    %26 = arith.truncf %25 : vector<4x16x16xf32> to vector<4x16x16xbf16>
    "tpu.trace_start"() <{level = 10 : i32, message = "bhk,bkw->bhw"}> : () -> ()
    %cst_18 = arith.constant dense<0.000000e+00> : vector<4x16x16xf32>
    %27 = tpu.matmul %6, %26, %cst_18 {dimension_numbers = #tpu.dot_dimension_numbers<[2], [1], [1], [2], [0, 0, 0, 1, 1, 2], [0], [0]>} : vector<4x16x16xbf16>, vector<4x16x16xbf16>, vector<4x16x16xf32> -> vector<4x16x16xf32>
    %cst_19 = arith.constant dense<0.000000e+00> : vector<4x16x16xf32>
    %28 = tpu.matmul %9, %26, %cst_19 {dimension_numbers = #tpu.dot_dimension_numbers<[2], [1], [1], [2], [0, 0, 0, 1, 1, 2], [0], [0]>} : vector<4x16x16xbf16>, vector<4x16x16xbf16>, vector<4x16x16xf32> -> vector<4x16x16xf32>
    "tpu.trace_stop"() : () -> ()
    %29 = arith.addf %27, %28 : vector<4x16x16xf32>
    %30 = arith.mulf %0, %0 : vector<4x16x16xf32>
    %31 = arith.truncf %30 : vector<4x16x16xf32> to vector<4x16x16xbf16>
    %32 = vector.shape_cast %31 : vector<4x16x16xbf16> to vector<64x16xbf16>
    %cst_20 = arith.constant dense<0.000000e+00> : vector<64x16xf32>
    %33 = tpu.matmul %32, %2, %cst_20 {dimension_numbers = #tpu.dot_dimension_numbers<[1], [0], [0], [1], [0, 0, 1, 1], [], []>} : vector<64x16xbf16>, vector<16x16xbf16>, vector<64x16xf32> -> vector<64x16xf32>
    %cst_21 = arith.constant dense<0.000000e+00> : vector<64x16xf32>
    %34 = tpu.matmul %32, %3, %cst_21 {dimension_numbers = #tpu.dot_dimension_numbers<[1], [0], [0], [1], [0, 0, 1, 1], [], []>} : vector<64x16xbf16>, vector<16x16xbf16>, vector<64x16xf32> -> vector<64x16xf32>
    %35 = arith.addf %33, %34 : vector<64x16xf32>
    %36 = vector.shape_cast %35 : vector<64x16xf32> to vector<4x16x16xf32>
    %37 = arith.truncf %36 : vector<4x16x16xf32> to vector<4x16x16xbf16>
    "tpu.trace_start"() <{level = 10 : i32, message = "bhk,bkw->bhw"}> : () -> ()
    %cst_22 = arith.constant dense<0.000000e+00> : vector<4x16x16xf32>
    %38 = tpu.matmul %6, %37, %cst_22 {dimension_numbers = #tpu.dot_dimension_numbers<[2], [1], [1], [2], [0, 0, 0, 1, 1, 2], [0], [0]>} : vector<4x16x16xbf16>, vector<4x16x16xbf16>, vector<4x16x16xf32> -> vector<4x16x16xf32>
    %cst_23 = arith.constant dense<0.000000e+00> : vector<4x16x16xf32>
    %39 = tpu.matmul %9, %37, %cst_23 {dimension_numbers = #tpu.dot_dimension_numbers<[2], [1], [1], [2], [0, 0, 0, 1, 1, 2], [0], [0]>} : vector<4x16x16xbf16>, vector<4x16x16xbf16>, vector<4x16x16xf32> -> vector<4x16x16xf32>
    "tpu.trace_stop"() : () -> ()
    %40 = arith.addf %38, %39 : vector<4x16x16xf32>
    %41 = arith.mulf %1, %1 : vector<4x16x16xf32>
    %42 = arith.truncf %41 : vector<4x16x16xf32> to vector<4x16x16xbf16>
    %43 = vector.shape_cast %42 : vector<4x16x16xbf16> to vector<64x16xbf16>
    %cst_24 = arith.constant dense<0.000000e+00> : vector<64x16xf32>
    %44 = tpu.matmul %43, %2, %cst_24 {dimension_numbers = #tpu.dot_dimension_numbers<[1], [0], [0], [1], [0, 0, 1, 1], [], []>} : vector<64x16xbf16>, vector<16x16xbf16>, vector<64x16xf32> -> vector<64x16xf32>
    %cst_25 = arith.constant dense<0.000000e+00> : vector<64x16xf32>
    %45 = tpu.matmul %43, %3, %cst_25 {dimension_numbers = #tpu.dot_dimension_numbers<[1], [0], [0], [1], [0, 0, 1, 1], [], []>} : vector<64x16xbf16>, vector<16x16xbf16>, vector<64x16xf32> -> vector<64x16xf32>
    %46 = arith.addf %44, %45 : vector<64x16xf32>
    %47 = vector.shape_cast %46 : vector<64x16xf32> to vector<4x16x16xf32>
    %48 = arith.truncf %47 : vector<4x16x16xf32> to vector<4x16x16xbf16>
    "tpu.trace_start"() <{level = 10 : i32, message = "bhk,bkw->bhw"}> : () -> ()
    %cst_26 = arith.constant dense<0.000000e+00> : vector<4x16x16xf32>
    %49 = tpu.matmul %6, %48, %cst_26 {dimension_numbers = #tpu.dot_dimension_numbers<[2], [1], [1], [2], [0, 0, 0, 1, 1, 2], [0], [0]>} : vector<4x16x16xbf16>, vector<4x16x16xbf16>, vector<4x16x16xf32> -> vector<4x16x16xf32>
    %cst_27 = arith.constant dense<0.000000e+00> : vector<4x16x16xf32>
    %50 = tpu.matmul %9, %48, %cst_27 {dimension_numbers = #tpu.dot_dimension_numbers<[2], [1], [1], [2], [0, 0, 0, 1, 1, 2], [0], [0]>} : vector<4x16x16xbf16>, vector<4x16x16xbf16>, vector<4x16x16xf32> -> vector<4x16x16xf32>
    "tpu.trace_stop"() : () -> ()
    %51 = arith.addf %49, %50 : vector<4x16x16xf32>
    %52 = arith.mulf %0, %1 : vector<4x16x16xf32>
    %53 = arith.truncf %52 : vector<4x16x16xf32> to vector<4x16x16xbf16>
    %54 = vector.shape_cast %53 : vector<4x16x16xbf16> to vector<64x16xbf16>
    %cst_28 = arith.constant dense<0.000000e+00> : vector<64x16xf32>
    %55 = tpu.matmul %54, %2, %cst_28 {dimension_numbers = #tpu.dot_dimension_numbers<[1], [0], [0], [1], [0, 0, 1, 1], [], []>} : vector<64x16xbf16>, vector<16x16xbf16>, vector<64x16xf32> -> vector<64x16xf32>
    %cst_29 = arith.constant dense<0.000000e+00> : vector<64x16xf32>
    %56 = tpu.matmul %54, %3, %cst_29 {dimension_numbers = #tpu.dot_dimension_numbers<[1], [0], [0], [1], [0, 0, 1, 1], [], []>} : vector<64x16xbf16>, vector<16x16xbf16>, vector<64x16xf32> -> vector<64x16xf32>
    %57 = arith.addf %55, %56 : vector<64x16xf32>
    %58 = vector.shape_cast %57 : vector<64x16xf32> to vector<4x16x16xf32>
    %59 = arith.truncf %58 : vector<4x16x16xf32> to vector<4x16x16xbf16>
    "tpu.trace_start"() <{level = 10 : i32, message = "bhk,bkw->bhw"}> : () -> ()
    %cst_30 = arith.constant dense<0.000000e+00> : vector<4x16x16xf32>
    %60 = tpu.matmul %6, %59, %cst_30 {dimension_numbers = #tpu.dot_dimension_numbers<[2], [1], [1], [2], [0, 0, 0, 1, 1, 2], [0], [0]>} : vector<4x16x16xbf16>, vector<4x16x16xbf16>, vector<4x16x16xf32> -> vector<4x16x16xf32>
    %cst_31 = arith.constant dense<0.000000e+00> : vector<4x16x16xf32>
    %61 = tpu.matmul %9, %59, %cst_31 {dimension_numbers = #tpu.dot_dimension_numbers<[2], [1], [1], [2], [0, 0, 0, 1, 1, 2], [0], [0]>} : vector<4x16x16xbf16>, vector<4x16x16xbf16>, vector<4x16x16xf32> -> vector<4x16x16xf32>
    "tpu.trace_stop"() : () -> ()
    %62 = arith.addf %60, %61 : vector<4x16x16xf32>
    %63 = arith.mulf %19, %19 : vector<4x16x16xf32>
    %64 = arith.mulf %29, %29 : vector<4x16x16xf32>
    %65 = arith.mulf %19, %29 : vector<4x16x16xf32>
    %66 = arith.subf %40, %63 : vector<4x16x16xf32>
    %67 = arith.subf %51, %64 : vector<4x16x16xf32>
    %68 = arith.subf %62, %65 : vector<4x16x16xf32>
    %cst_32 = arith.constant 2.000000e+00 : f32
    %69 = vector.broadcast %cst_32 : f32 to vector<4x16x16xf32>
    %70 = arith.mulf %69, %65 : vector<4x16x16xf32>
    %cst_33 = arith.constant 9.99999974E-5 : f32
    %71 = vector.broadcast %cst_33 : f32 to vector<4x16x16xf32>
    %72 = arith.addf %70, %71 : vector<4x16x16xf32>
    %cst_34 = arith.constant 2.000000e+00 : f32
    %73 = vector.broadcast %cst_34 : f32 to vector<4x16x16xf32>
    %74 = arith.mulf %73, %68 : vector<4x16x16xf32>
    %cst_35 = arith.constant 8.99999984E-4 : f32
    %75 = vector.broadcast %cst_35 : f32 to vector<4x16x16xf32>
    %76 = arith.addf %74, %75 : vector<4x16x16xf32>
    %77 = arith.mulf %72, %76 : vector<4x16x16xf32>
    %78 = arith.addf %63, %64 : vector<4x16x16xf32>
    %cst_36 = arith.constant 9.99999974E-5 : f32
    %79 = vector.broadcast %cst_36 : f32 to vector<4x16x16xf32>
    %80 = arith.addf %78, %79 : vector<4x16x16xf32>
    %81 = arith.addf %66, %67 : vector<4x16x16xf32>
    %cst_37 = arith.constant 8.99999984E-4 : f32
    %82 = vector.broadcast %cst_37 : f32 to vector<4x16x16xf32>
    %83 = arith.addf %81, %82 : vector<4x16x16xf32>
    %84 = arith.mulf %80, %83 : vector<4x16x16xf32>
    %85 = tpu.reciprocal %84 {approx = true} : vector<4x16x16xf32> -> vector<4x16x16xf32>
    %86 = arith.mulf %84, %85 : vector<4x16x16xf32>
    %cst_38 = arith.constant 2.000000e+00 : f32
    %87 = vector.broadcast %cst_38 : f32 to vector<4x16x16xf32>
    %88 = arith.subf %87, %86 : vector<4x16x16xf32>
    %89 = arith.mulf %85, %88 : vector<4x16x16xf32>
    %90 = arith.mulf %77, %89 : vector<4x16x16xf32>
    %cst_39 = arith.constant dense<0.000000e+00> : vector<4x16xf32>
    %91 = vector.multi_reduction <add>, %90, %cst_39 [2] : vector<4x16x16xf32> to vector<4x16xf32>
    %cst_40 = arith.constant dense<0.000000e+00> : vector<4xf32>
    %92 = vector.multi_reduction <add>, %91, %cst_40 [1] : vector<4x16xf32> to vector<4xf32>
    %93 = vector.shape_cast %92 : vector<4xf32> to vector<4x1xf32>
    %c0_41 = arith.constant 0 : index
    %c0_42 = arith.constant 0 : index
    %c0_43 = arith.constant 0 : index
    %94 = vector.load %arg7[%c0_41, %c0_42, %c0_43] : memref<1x4x1xf32, #tpu.memory_space<vmem>>, vector<1x4x1xf32>
    %95 = vector.shape_cast %94 : vector<1x4x1xf32> to vector<4x1xf32>
    %96 = vector.shape_cast %93 : vector<4x1xf32> to vector<1x4x1xf32>
    tpu.vector_store %arg7[%c0_41, %c0_42, %c0_43], %96 {strides = array<i32>} : memref<1x4x1xf32, #tpu.memory_space<vmem>>, vector<1x4x1xf32>,
    return
  }
  func.func @transform_0(%arg0: i32) -> (i32, i32, i32) {
    %c0_i32 = arith.constant 0 : i32
    %c0_i32_0 = arith.constant 0 : i32
    %c0_i32_1 = arith.constant 0 : i32
    return %arg0, %c0_i32, %c0_i32_0 : i32, i32, i32
  }
  func.func @transform_1(%arg0: i32) -> (i32, i32, i32) {
    %c0_i32 = arith.constant 0 : i32
    %c0_i32_0 = arith.constant 0 : i32
    %c0_i32_1 = arith.constant 0 : i32
    return %arg0, %c0_i32, %c0_i32_0 : i32, i32, i32
  }
  func.func @transform_2(%arg0: i32) -> (i32, i32) {
    %c0_i32 = arith.constant 0 : i32
    %c0_i32_0 = arith.constant 0 : i32
    %c0_i32_1 = arith.constant 0 : i32
    return %c0_i32, %c0_i32_0 : i32, i32
  }
  func.func @transform_3(%arg0: i32) -> (i32, i32) {
    %c0_i32 = arith.constant 0 : i32
    %c0_i32_0 = arith.constant 0 : i32
    %c0_i32_1 = arith.constant 0 : i32
    return %c0_i32, %c0_i32_0 : i32, i32
  }
  func.func @transform_4(%arg0: i32) -> (i32, i32) {
    %c0_i32 = arith.constant 0 : i32
    %c0_i32_0 = arith.constant 0 : i32
    %c0_i32_1 = arith.constant 0 : i32
    return %c0_i32, %c0_i32_0 : i32, i32
  }
  func.func @transform_5(%arg0: i32) -> (i32, i32) {
    %c0_i32 = arith.constant 0 : i32
    %c0_i32_0 = arith.constant 0 : i32
    %c0_i32_1 = arith.constant 0 : i32
    return %c0_i32, %c0_i32_0 : i32, i32
  }
  func.func @transform_6(%arg0: i32) -> (i32, i32, i32) {
    %c0_i32 = arith.constant 0 : i32
    %c0_i32_0 = arith.constant 0 : i32
    %c0_i32_1 = arith.constant 0 : i32
    return %arg0, %c0_i32, %c0_i32_0 : i32, i32, i32
  }
}

</mosaic_0001>

<llo_original>
// kernel: tpu_custom_call.1
$region0: #{tpu_custom_call.1}
  #allocation0 [shape = 'u32[]', space=smem, size = 0x4, offset = 0x4, fixed_abs, tag = 'smem constant byte address 0x4 - core index']
  #allocation1 [shape = 'u32[72,128]{1,0:T(1,128)}', space=vmem, size = 0x9000, scoped, tag = 'internal scratch']
  %s0 = inlined_call_operand.hbm [shape: f32[8,16,16], index: 0, kind: input, shape index: {}]
  %s1 = inlined_call_operand.hbm [shape: f32[8,16,16], index: 1, kind: input, shape index: {}]
  %s2 = inlined_call_operand.hbm [shape: bf16[16,16], index: 2, kind: input, shape index: {}]
  %s3 = inlined_call_operand.hbm [shape: bf16[16,16], index: 3, kind: input, shape index: {}]
  %s4 = inlined_call_operand.hbm [shape: bf16[16,16], index: 4, kind: input, shape index: {}]
  %s5 = inlined_call_operand.hbm [shape: bf16[16,16], index: 5, kind: input, shape index: {}]
  %s6 = inlined_call_operand.vmem [shape: f32[2,4,1], index: 6, kind: output, shape index: {}]
  %s7 = sld [smem:[#allocation0]]
  $region81: #{tpu_custom_call.1} parent=0
    _
  %s9 = ssub.s32 1, %s7
  %s10 = scalar_select 0, %s9, %s7
  $region1: #{tpu_custom_call.1} parent=0
    #allocation2 [shape = 'u8[65536]{0}', space=vmem, size = 0x10000, scoped, tag = 'input window, operand 0']
    #allocation3 [shape = 's32[2]{0}', space=sflag, size = 0x8, scoped, tag = 'scoped memory for tpu_custom_call.1']
    #allocation4 [shape = 'u8[65536]{0}', space=vmem, size = 0x10000, scoped, tag = 'input window, operand 1']
    #allocation5 [shape = 's32[2]{0}', space=sflag, size = 0x8, scoped, tag = 'scoped memory for tpu_custom_call.1']
    #allocation6 [shape = 'u8[4096]{0}', space=vmem, size = 0x1000, scoped, tag = 'input window, operand 2, single buffered']
    #allocation7 [shape = 'u8[4096]{0}', space=vmem, size = 0x1000, scoped, tag = 'input window, operand 3, single buffered']
    #allocation8 [shape = 's32[1]{0}', space=sflag, size = 0x4, scoped, tag = 'scoped memory for tpu_custom_call.1']
    #allocation9 [shape = 'u8[4096]{0}', space=vmem, size = 0x1000, scoped, tag = 'input window, operand 4, single buffered']
    #allocation10 [shape = 'u8[4096]{0}', space=vmem, size = 0x1000, scoped, tag = 'input window, operand 5, single buffered']
    #allocation11 [shape = 's32[1]{0}', space=sflag, size = 0x4, scoped, tag = 'scoped memory for tpu_custom_call.1']
    %11 = vsyncpa [#allocation3], 0
    %s12 = scalar_lea.sflag [#allocation3], 1
    %13 = vsyncpa %s12, 0
    %14 = vsyncpa [#allocation5], 0
    %s15 = scalar_lea.sflag [#allocation5], 1
    %16 = vsyncpa %s15, 0
    %17 = vsyncpa [#allocation8], 0
    %18 = vsyncpa [#allocation11], 0
    loop: start=0, step=1, limit=4
    $region2: #{tpu_custom_call.1} parent=1 // loop_pre_header
      _
    $region3: #{tpu_custom_call.1} parent=1 // loop_header
      %s20 = sphi 0, %s24
      %p21 = scmp.ge.s32.totalorder %s20, 4
      %s30 = sphi 0, %s32
      %s33 = sphi 0, %s30
      %s34 = sphi 0, %s33
      %s50 = sphi 0, %s34
      %s56 = sphi 0, %s58
      %s59 = sphi 0, %s56
      %s60 = sphi 0, %s59
      %s76 = sphi 0, %s60
      %s80 = sphi 0, %s80
      %s82 = sphi 0, %s80
      %s83 = sphi 0, %s82
      %s97 = sphi 0, %s83
      %s101 = sphi 0, %s101
      %s103 = sphi 0, %s101
      %s104 = sphi 0, %s103
      %s118 = sphi 0, %s104
      %s122 = sphi 0, %s122
      %s124 = sphi 0, %s122
      %s125 = sphi 0, %s124
      %s139 = sphi 0, %s125
      %s143 = sphi 0, %s143
      %s145 = sphi 0, %s143
      %s146 = sphi 0, %s145
      %s160 = sphi 0, %s146
      %s166 = sphi 0, %s168
      %s169 = sphi 0, %s166
      %s170 = sphi 0, %s169
      %s186 = sphi 0, %s170
    $region4: #{tpu_custom_call.1} parent=1 // loop_header_branch
      %23 = sbr.rel (%p21) target = $region8
    $region5: #{tpu_custom_call.1} parent=1 // loop_body
      %s25 = ssub.s32 %s20, 1
      %s26 = ssub.s32 %s20, 2
      %s27 = sadd.s32 %s20, 1
      %s28 = ssub.s32 %s20, %s27
      %p29 = scmp.eq.s32.totalorder %s28, 0
      %s31 = sadd.s32 %s30, 1
      %s32 = scalar_select %p29, %s30, %s31
      %p35 = pneg %p29
      %p36 = scmp.eq.s32.totalorder %s20, 1
      %p37 = por %p35, %p36
      %p38 = scmp.ne.s32.totalorder %s30, %s33
      %p39 = scmp.eq.s32.totalorder %s20, 0
      %p40 = por %p38, %p39
      %p41 = scmp.ne.s32.totalorder %s30, %s33
      %p42 = scmp.eq.s32.totalorder %s25, 1
      %p43 = por %p41, %p42
      %p44 = scmp.ne.s32.totalorder %s33, %s34
      %p45 = scmp.eq.s32.totalorder %s25, 0
      %p46 = por %p44, %p45
      %p47 = scmp.ne.s32.totalorder %s33, %s34
      %p48 = scmp.eq.s32.totalorder %s26, 1
      %p49 = por %p47, %p48
      %p51 = scmp.ne.s32.totalorder %s34, %s50
      %p52 = scmp.eq.s32.totalorder %s26, 0
      %p53 = por %p51, %p52
      %s54 = ssub.s32 %s20, %s27
      %p55 = scmp.eq.s32.totalorder %s54, 0
      %s57 = sadd.s32 %s56, 1
      %s58 = scalar_select %p55, %s56, %s57
      %p61 = pneg %p55
      %p62 = scmp.eq.s32.totalorder %s20, 1
      %p63 = por %p61, %p62
      %p64 = scmp.ne.s32.totalorder %s56, %s59
      %p65 = scmp.eq.s32.totalorder %s20, 0
      %p66 = por %p64, %p65
      %p67 = scmp.ne.s32.totalorder %s56, %s59
      %p68 = scmp.eq.s32.totalorder %s25, 1
      %p69 = por %p67, %p68
      %p70 = scmp.ne.s32.totalorder %s59, %s60
      %p71 = scmp.eq.s32.totalorder %s25, 0
      %p72 = por %p70, %p71
      %p73 = scmp.ne.s32.totalorder %s59, %s60
      %p74 = scmp.eq.s32.totalorder %s26, 1
      %p75 = por %p73, %p74
      %p77 = scmp.ne.s32.totalorder %s60, %s76
      %p78 = scmp.eq.s32.totalorder %s26, 0
      %p79 = por %p77, %p78
      %s81 = sadd.s32 %s80, 1
      %p84 = scmp.eq.s32.totalorder %s20, 1
      %p85 = scmp.ne.s32.totalorder %s80, %s82
      %p86 = scmp.eq.s32.totalorder %s20, 0
      %p87 = por %p85, %p86
      %p88 = scmp.ne.s32.totalorder %s80, %s82
      %p89 = scmp.eq.s32.totalorder %s25, 1
      %p90 = por %p88, %p89
      %p91 = scmp.ne.s32.totalorder %s82, %s83
      %p92 = scmp.eq.s32.totalorder %s25, 0
      %p93 = por %p91, %p92
      %p94 = scmp.ne.s32.totalorder %s82, %s83
      %p95 = scmp.eq.s32.totalorder %s26, 1
      %p96 = por %p94, %p95
      %p98 = scmp.ne.s32.totalorder %s83, %s97
      %p99 = scmp.eq.s32.totalorder %s26, 0
      %p100 = por %p98, %p99
      %s102 = sadd.s32 %s101, 1
      %p105 = scmp.eq.s32.totalorder %s20, 1
      %p106 = scmp.ne.s32.totalorder %s101, %s103
      %p107 = scmp.eq.s32.totalorder %s20, 0
      %p108 = por %p106, %p107
      %p109 = scmp.ne.s32.totalorder %s101, %s103
      %p110 = scmp.eq.s32.totalorder %s25, 1
      %p111 = por %p109, %p110
      %p112 = scmp.ne.s32.totalorder %s103, %s104
      %p113 = scmp.eq.s32.totalorder %s25, 0
      %p114 = por %p112, %p113
      %p115 = scmp.ne.s32.totalorder %s103, %s104
      %p116 = scmp.eq.s32.totalorder %s26, 1
      %p117 = por %p115, %p116
      %p119 = scmp.ne.s32.totalorder %s104, %s118
      %p120 = scmp.eq.s32.totalorder %s26, 0
      %p121 = por %p119, %p120
      %s123 = sadd.s32 %s122, 1
      %p126 = scmp.eq.s32.totalorder %s20, 1
      %p127 = scmp.ne.s32.totalorder %s122, %s124
      %p128 = scmp.eq.s32.totalorder %s20, 0
      %p129 = por %p127, %p128
      %p130 = scmp.ne.s32.totalorder %s122, %s124
      %p131 = scmp.eq.s32.totalorder %s25, 1
      %p132 = por %p130, %p131
      %p133 = scmp.ne.s32.totalorder %s124, %s125
      %p134 = scmp.eq.s32.totalorder %s25, 0
      %p135 = por %p133, %p134
      %p136 = scmp.ne.s32.totalorder %s124, %s125
      %p137 = scmp.eq.s32.totalorder %s26, 1
      %p138 = por %p136, %p137
      %p140 = scmp.ne.s32.totalorder %s125, %s139
      %p141 = scmp.eq.s32.totalorder %s26, 0
      %p142 = por %p140, %p141
      %s144 = sadd.s32 %s143, 1
      %p147 = scmp.eq.s32.totalorder %s20, 1
      %p148 = scmp.ne.s32.totalorder %s143, %s145
      %p149 = scmp.eq.s32.totalorder %s20, 0
      %p150 = por %p148, %p149
      %p151 = scmp.ne.s32.totalorder %s143, %s145
      %p152 = scmp.eq.s32.totalorder %s25, 1
      %p153 = por %p151, %p152
      %p154 = scmp.ne.s32.totalorder %s145, %s146
      %p155 = scmp.eq.s32.totalorder %s25, 0
      %p156 = por %p154, %p155
      %p157 = scmp.ne.s32.totalorder %s145, %s146
      %p158 = scmp.eq.s32.totalorder %s26, 1
      %p159 = por %p157, %p158
      %p161 = scmp.ne.s32.totalorder %s146, %s160
      %p162 = scmp.eq.s32.totalorder %s26, 0
      %p163 = por %p161, %p162
      %s164 = ssub.s32 %s20, %s27
      %p165 = scmp.eq.s32.totalorder %s164, 0
      %s167 = sadd.s32 %s166, 1
      %s168 = scalar_select %p165, %s166, %s167
      %p171 = pneg %p165
      %p172 = scmp.eq.s32.totalorder %s20, 1
      %p173 = por %p171, %p172
      %p174 = scmp.ne.s32.totalorder %s166, %s169
      %p175 = scmp.eq.s32.totalorder %s20, 0
      %p176 = por %p174, %p175
      %p177 = scmp.ne.s32.totalorder %s166, %s169
      %p178 = scmp.eq.s32.totalorder %s25, 1
      %p179 = por %p177, %p178
      %p180 = scmp.ne.s32.totalorder %s169, %s170
      %p181 = scmp.eq.s32.totalorder %s25, 0
      %p182 = por %p180, %p181
      %p183 = scmp.ne.s32.totalorder %s169, %s170
      %p184 = scmp.eq.s32.totalorder %s26, 1
      %p185 = por %p183, %p184
      %p187 = scmp.ne.s32.totalorder %s170, %s186
      %p188 = scmp.eq.s32.totalorder %s26, 0
      %p189 = por %p187, %p188
      %p190 = scmp.le.s32.totalorder 1, %s20
      %p191 = scmp.lt.s32.totalorder %s20, 3
      %p192 = pnand %p190, %p191
      %p193 = pneg %p192
      // Predicated region
      $region9: #{tpu_custom_call.1} parent=5 // pred_check
        _
      $region10: #{tpu_custom_call.1} parent=5 // pred_check_branch
        %195 = sbr.rel (%p192) target = $region12
      $region11: #{tpu_custom_call.1} parent=5 // pred_region
        %s196 = ssub.s32 %s20, 1
        // Predicated region
        $region13: #{tpu_custom_call.1} parent=11 // pred_check
          %p197 = pneg %p93
        $region14: #{tpu_custom_call.1} parent=11 // pred_check_branch
          %199 = sbr.rel (%p197) target = $region16
        $region15: #{tpu_custom_call.1} parent=11 // pred_region
          %201 = vsyncadd [#allocation5], 0
          %s202 = sshll.u32 %s2, 4
          %s203 = int_to_ptr.hbm [resolvable:$true] %s202
          %s204 = sshll.u32 [#allocation6], 4
          %s205 = int_to_ptr.vmem [resolvable:$true] %s204
          %210 = dma.hbm_to_vmem [thread:$0]  %s203, 128, %s205, [#allocation5], 64, 64, 4
        $region16: #{tpu_custom_call.1} parent=11 // pred_fallthru
          _
        // Predicated region
        $region17: #{tpu_custom_call.1} parent=11 // pred_check
          %p211 = pneg %p114
        $region18: #{tpu_custom_call.1} parent=11 // pred_check_branch
          %213 = sbr.rel (%p211) target = $region20
        $region19: #{tpu_custom_call.1} parent=11 // pred_region
          %215 = vsyncadd [#allocation8], 0
          %s216 = sshll.u32 %s3, 4
          %s217 = int_to_ptr.hbm [resolvable:$true] %s216
          %s218 = sshll.u32 [#allocation7], 4
          %s219 = int_to_ptr.vmem [resolvable:$true] %s218
          %224 = dma.hbm_to_vmem [thread:$0]  %s217, 128, %s219, [#allocation8], 64, 64, 4
        $region20: #{tpu_custom_call.1} parent=11 // pred_fallthru
          _
        // Predicated region
        $region21: #{tpu_custom_call.1} parent=11 // pred_check
          %p225 = pneg %p135
        $region22: #{tpu_custom_call.1} parent=11 // pred_check_branch
          %227 = sbr.rel (%p225) target = $region24
        $region23: #{tpu_custom_call.1} parent=11 // pred_region
          %229 = vsyncadd [#allocation8], 0
          %s230 = sshll.u32 %s4, 4
          %s231 = int_to_ptr.hbm [resolvable:$true] %s230
          %s232 = sshll.u32 [#allocation9], 4
          %s233 = int_to_ptr.vmem [resolvable:$true] %s232
          %238 = dma.hbm_to_vmem [thread:$0]  %s231, 128, %s233, [#allocation8], 64, 64, 4
        $region24: #{tpu_custom_call.1} parent=11 // pred_fallthru
          _
        // Predicated region
        $region25: #{tpu_custom_call.1} parent=11 // pred_check
          %p239 = pneg %p156
        $region26: #{tpu_custom_call.1} parent=11 // pred_check_branch
          %241 = sbr.rel (%p239) target = $region28
        $region27: #{tpu_custom_call.1} parent=11 // pred_region
          %243 = vsyncadd [#allocation11], 0
          %s244 = sshll.u32 %s5, 4
          %s245 = int_to_ptr.hbm [resolvable:$true] %s244
          %s246 = sshll.u32 [#allocation10], 4
          %s247 = int_to_ptr.vmem [resolvable:$true] %s246
          %252 = dma.hbm_to_vmem [thread:$0]  %s245, 128, %s247, [#allocation11], 64, 64, 4
        $region28: #{tpu_custom_call.1} parent=11 // pred_fallthru
          _
      $region12: #{tpu_custom_call.1} parent=5 // pred_fallthru
        _
      %p253 = scmp.lt.s32.totalorder %s20, 2
      // Predicated region
      $region29: #{tpu_custom_call.1} parent=5 // pred_check
        %p254 = pneg %p253
      $region30: #{tpu_custom_call.1} parent=5 // pred_check_branch
        %256 = sbr.rel (%p254) target = $region32
      $region31: #{tpu_custom_call.1} parent=5 // pred_region
        // Predicated region
        $region33: #{tpu_custom_call.1} parent=31 // pred_check
          %p257 = pneg %p40
        $region34: #{tpu_custom_call.1} parent=31 // pred_check_branch
          %259 = sbr.rel (%p257) target = $region36
        $region35: #{tpu_custom_call.1} parent=31 // pred_region
          %s260 = sand.u32 %s30, 1
          %s261 = scalar_lea.sflag [#allocation3], %s260
          %s262 = sand.u32 %s30, 1
          %s263 = smul.addr %s262, 64
          %s264 = scalar_lea.vmem [#allocation2], %s263
          %s265 = smul.u32 4, %s20
          %267 = vsyncadd %s261, 0
          %s268 = smul.addr %s265, 2
          %s269 = smul.addr %s268, 8
          %s270 = scalar_lea.hbm %s0, %s269
          %s271 = sshll.u32 %s270, 4
          %s272 = int_to_ptr.hbm [resolvable:$true] %s271
          %s273 = sshll.u32 %s264, 4
          %s274 = int_to_ptr.vmem [resolvable:$true] %s273
          %279 = dma.hbm_to_vmem [thread:$0]  %s272, 1024, %s274, %s261, 128, 128, 8
        $region36: #{tpu_custom_call.1} parent=31 // pred_fallthru
          _
        // Predicated region
        $region37: #{tpu_custom_call.1} parent=31 // pred_check
          %p280 = pneg %p66
        $region38: #{tpu_custom_call.1} parent=31 // pred_check_branch
          %282 = sbr.rel (%p280) target = $region40
        $region39: #{tpu_custom_call.1} parent=31 // pred_region
          %s283 = sand.u32 %s20, 1
          %s284 = scalar_lea.sflag [#allocation5], %s283
          %s285 = sand.u32 %s56, 1
          %s286 = smul.addr %s285, 64
          %s287 = scalar_lea.vmem [#allocation4], %s286
          %s288 = smul.u32 4, %s20
          %290 = vsyncadd %s284, 0
          %s291 = smul.addr %s288, 2
          %s292 = smul.addr %s291, 8
          %s293 = scalar_lea.hbm %s1, %s292
          %s294 = sshll.u32 %s293, 4
          %s295 = int_to_ptr.hbm [resolvable:$true] %s294
          %s296 = sshll.u32 %s287, 4
          %s297 = int_to_ptr.vmem [resolvable:$true] %s296
          %302 = dma.hbm_to_vmem [thread:$0]  %s295, 1024, %s297, %s284, 128, 128, 8
        $region40: #{tpu_custom_call.1} parent=31 // pred_fallthru
          _
      $region32: #{tpu_custom_call.1} parent=5 // pred_fallthru
        _
      %p303 = scmp.le.s32.totalorder 1, %s20
      %p304 = scmp.lt.s32.totalorder %s20, 3
      %p305 = pnand %p303, %p304
      %p306 = pneg %p305
      // Predicated region
      $region41: #{tpu_custom_call.1} parent=5 // pred_check
        _
      $region42: #{tpu_custom_call.1} parent=5 // pred_check_branch
        %308 = sbr.rel (%p305) target = $region44
      $region43: #{tpu_custom_call.1} parent=5 // pred_region
        %s309 = ssub.s32 %s20, 1
        %s310 = sand.u32 %s33, 1
        %s311 = scalar_lea.sflag [#allocation3], %s310
        %s312 = sand.u32 %s33, 1
        %s313 = smul.addr %s312, 64
        %s314 = scalar_lea.vmem [#allocation2], %s313
        // Predicated region
        $region45: #{tpu_custom_call.1} parent=43 // pred_check
          %p315 = pneg %p46
        $region46: #{tpu_custom_call.1} parent=43 // pred_check_branch
          %317 = sbr.rel (%p315) target = $region48
        $region47: #{tpu_custom_call.1} parent=43 // pred_region
          %319 = dma.done %s311, 1024
        $region48: #{tpu_custom_call.1} parent=43 // pred_fallthru
          _
        %s320 = sand.u32 %s25, 1
        %s321 = scalar_lea.sflag [#allocation5], %s320
        %s322 = sand.u32 %s59, 1
        %s323 = smul.addr %s322, 64
        %s324 = scalar_lea.vmem [#allocation4], %s323
        // Predicated region
        $region49: #{tpu_custom_call.1} parent=43 // pred_check
          %p325 = pneg %p72
        $region50: #{tpu_custom_call.1} parent=43 // pred_check_branch
          %327 = sbr.rel (%p325) target = $region52
        $region51: #{tpu_custom_call.1} parent=43 // pred_region
          %329 = dma.done %s321, 1024
        $region52: #{tpu_custom_call.1} parent=43 // pred_fallthru
          _
        // Predicated region
        $region53: #{tpu_custom_call.1} parent=43 // pred_check
          %p330 = pneg %p93
        $region54: #{tpu_custom_call.1} parent=43 // pred_check_branch
          %332 = sbr.rel (%p330) target = $region56
        $region55: #{tpu_custom_call.1} parent=43 // pred_region
          %334 = dma.done [#allocation5], 128
        $region56: #{tpu_custom_call.1} parent=43 // pred_fallthru
          _
        // Predicated region
        $region57: #{tpu_custom_call.1} parent=43 // pred_check
          %p335 = pneg %p114
        $region58: #{tpu_custom_call.1} parent=43 // pred_check_branch
          %337 = sbr.rel (%p335) target = $region60
        $region59: #{tpu_custom_call.1} parent=43 // pred_region
          %339 = dma.done [#allocation8], 128
        $region60: #{tpu_custom_call.1} parent=43 // pred_fallthru
          _
        // Predicated region
        $region61: #{tpu_custom_call.1} parent=43 // pred_check
          %p340 = pneg %p135
        $region62: #{tpu_custom_call.1} parent=43 // pred_check_branch
          %342 = sbr.rel (%p340) target = $region64
        $region63: #{tpu_custom_call.1} parent=43 // pred_region
          %344 = dma.done [#allocation8], 128
        $region64: #{tpu_custom_call.1} parent=43 // pred_fallthru
          _
        // Predicated region
        $region65: #{tpu_custom_call.1} parent=43 // pred_check
          %p345 = pneg %p156
        $region66: #{tpu_custom_call.1} parent=43 // pred_check_branch
          %347 = sbr.rel (%p345) target = $region68
        $region67: #{tpu_custom_call.1} parent=43 // pred_region
          %349 = dma.done [#allocation11], 128
        $region68: #{tpu_custom_call.1} parent=43 // pred_fallthru
          _
        %s350 = sand.u32 %s33, 1
        %s351 = scalar_lea.sflag [#allocation3], %s350
        %s352 = sand.u32 %s33, 1
        %s353 = smul.addr %s352, 64
        %s354 = scalar_lea.vmem [#allocation2], %s353
        %p355 = pneg %p46
        %p356 = pneg %p43
        %s357 = sand.u32 %s25, 1
        %s358 = scalar_lea.sflag [#allocation5], %s357
        %s359 = sand.u32 %s59, 1
        %s360 = smul.addr %s359, 64
        %s361 = scalar_lea.vmem [#allocation4], %s360
        %p362 = pneg %p72
        %p363 = pneg %p69
        %p364 = pneg %p93
        %p365 = pneg %p90
        %p366 = pneg %p114
        %p367 = pneg %p111
        %p368 = pneg %p135
        %p369 = pneg %p132
        %p370 = pneg %p156
        %p371 = pneg %p153
        %p372 = pneg %p182
        %p373 = pneg %p179
        %p374 = scmp.lt.s32.totalorder %s25, 1
        %s375 = scalar_select %p374, %s25, 1
        %s376 = smul.addr %s375, 4
        %s377 = scalar_lea.vmem %s6, %s376
        %s378 = smul.u32 4, %s25
        %s379 = smul.u32 4, %s25
        %p380 = scmp.lt.s32.totalorder %s25, 1
        %s381 = scalar_select %p380, %s25, 1
        %s382 = smul.addr %s381, 4
        %s383 = scalar_lea.vmem %s6, %s382
        %v385 = vld [vmem:[%s314] sm:$0xff]
        %v386 = vld [vmem:[%s314 + $0x8] sm:$0xff]
        %v387 = vld [vmem:[%s314 + $0x10] sm:$0xff]
        %v388 = vld [vmem:[%s314 + $0x18] sm:$0xff]
        %v389 = vld [vmem:[%s314 + $0x20] sm:$0xff]
        %v390 = vld [vmem:[%s314 + $0x28] sm:$0xff]
        %v391 = vld [vmem:[%s314 + $0x30] sm:$0xff]
        %v392 = vld [vmem:[%s314 + $0x38] sm:$0xff]
        %v393 = vld [vmem:[%s324] sm:$0xff]
        %v394 = vld [vmem:[%s324 + $0x8] sm:$0xff]
        %v395 = vld [vmem:[%s324 + $0x10] sm:$0xff]
        %v396 = vld [vmem:[%s324 + $0x18] sm:$0xff]
        %v397 = vld [vmem:[%s324 + $0x20] sm:$0xff]
        %v398 = vld [vmem:[%s324 + $0x28] sm:$0xff]
        %v399 = vld [vmem:[%s324 + $0x30] sm:$0xff]
        %v400 = vld [vmem:[%s324 + $0x38] sm:$0xff]
        %v401 = vld [vmem:[#allocation9] sm:$0xf]
        %v402 = vld [vmem:[#allocation9 + $0x4] sm:$0xf]
        %v403 = vld [vmem:[#allocation10] sm:$0xf]
        %v404 = vld [vmem:[#allocation10 + $0x4] sm:$0xf]
        %v405 = vld [vmem:[#allocation6] sm:$0xf]
        %v406 = vld [vmem:[#allocation6 + $0x4] sm:$0xf]
        %v407 = vld [vmem:[#allocation7] sm:$0xf]
        %v408 = vld [vmem:[#allocation7 + $0x4] sm:$0xf]
        %v409 = vpack.c.bf16 %v385, %v385
        %v410 = vpack.c.bf16 %v386, %v386
        %v411 = vpack.c.bf16 %v387, %v387
        %v412 = vpack.c.bf16 %v388, %v388
        %v413 = vpack.c.bf16 %v389, %v389
        %v414 = vpack.c.bf16 %v390, %v390
        %v415 = vpack.c.bf16 %v391, %v391
        %v416 = vpack.c.bf16 %v392, %v392
        %v425 = vunpack.c.l.b16 %v409
        %v426 = vunpack.c.l.b16 %v410
        %v427 = vunpack.c.l.b16 %v411
        %v428 = vunpack.c.l.b16 %v412
        %v429 = vunpack.c.l.b16 %v413
        %v430 = vunpack.c.l.b16 %v414
        %v431 = vunpack.c.l.b16 %v415
        %v432 = vunpack.c.l.b16 %v416
        %v433 = vpack.c.b16 %v426, %v425
        %v434 = vpack.c.b16 %v428, %v427
        %v435 = vpack.c.b16 %v430, %v429
        %v436 = vpack.c.b16 %v432, %v431
        %v439 = vunpack.c.l.b16 %v403
        %v440 = vunpack.c.l.b16 %v404
        %v441 = vpack.c.b16 %v440, %v439
        %vm443 = vcmask 130048
        %v445 = vsel %vm443, %v433, 0
        %v448 = vsel %vm443, %v434, 0
        %v451 = vsel %vm443, %v435, 0
        %v454 = vsel %vm443, %v436, 0
        %456 = vmatpush.bf16.msra.mxu0 0
        %457 = vmatpush.bf16.msra.mxu0 0
        %458 = vmatpush.bf16.msra.mxu0 0
        %459 = vmatpush.bf16.msra.mxu0 0
        %460 = vmatpush.bf16.msra.mxu0 0
        %461 = vmatpush.bf16.msra.mxu0 0
        %462 = vmatpush.bf16.msra.mxu0 0
        %463 = vmatpush.bf16.msra.mxu0 %v441
        %464 = vmatmul.bf16.gmra.mxu0 %v445
        %v465 = vpop.f32.mrf.mxu0
        %v466 = vadd.f32 0.0, %v465
        %v467 = vpop.f32.mrf.mxu0
        %v468 = vadd.f32 0.0, %v467
        %469 = vmatmul.bf16.gmra.mxu0 %v448
        %v470 = vpop.f32.mrf.mxu0
        %v471 = vadd.f32 0.0, %v470
        %v472 = vpop.f32.mrf.mxu0
        %v473 = vadd.f32 0.0, %v472
        %474 = vmatmul.bf16.gmra.mxu0 %v451
        %v475 = vpop.f32.mrf.mxu0
        %v476 = vadd.f32 0.0, %v475
        %v477 = vpop.f32.mrf.mxu0
        %v478 = vadd.f32 0.0, %v477
        %479 = vmatmul.bf16.gmra.mxu0 %v454
        %v480 = vpop.f32.mrf.mxu0
        %v481 = vadd.f32 0.0, %v480
        %v482 = vpop.f32.mrf.mxu0
        %v483 = vadd.f32 0.0, %v482
        %484 = vdwg.mxu0
        %v487 = vunpack.c.l.b16 %v401
        %v488 = vunpack.c.l.b16 %v402
        %v489 = vpack.c.b16 %v488, %v487
        %491 = vmatpush.bf16.msra.mxu0 0
        %492 = vmatpush.bf16.msra.mxu0 0
        %493 = vmatpush.bf16.msra.mxu0 0
        %494 = vmatpush.bf16.msra.mxu0 0
        %495 = vmatpush.bf16.msra.mxu0 0
        %496 = vmatpush.bf16.msra.mxu0 0
        %497 = vmatpush.bf16.msra.mxu0 0
        %498 = vmatpush.bf16.msra.mxu0 %v489
        %499 = vmatmul.bf16.gmra.mxu0 %v445
        %v500 = vpop.f32.mrf.mxu0
        %v501 = vadd.f32 %v466, %v500
        %v502 = vpop.f32.mrf.mxu0
        %v503 = vadd.f32 %v468, %v502
        %504 = vmatmul.bf16.gmra.mxu0 %v448
        %v505 = vpop.f32.mrf.mxu0
        %v506 = vadd.f32 %v471, %v505
        %v507 = vpop.f32.mrf.mxu0
        %v508 = vadd.f32 %v473, %v507
        %509 = vmatmul.bf16.gmra.mxu0 %v451
        %v510 = vpop.f32.mrf.mxu0
        %v511 = vadd.f32 %v476, %v510
        %v512 = vpop.f32.mrf.mxu0
        %v513 = vadd.f32 %v478, %v512
        %514 = vmatmul.bf16.gmra.mxu0 %v454
        %v515 = vpop.f32.mrf.mxu0
        %v516 = vadd.f32 %v481, %v515
        %v517 = vpop.f32.mrf.mxu0
        %v518 = vadd.f32 %v483, %v517
        %519 = vdwg.mxu0
        %v520 = vpack.c.bf16 %v501, %v501
        %v521 = vpack.c.bf16 %v503, %v503
        %v522 = vpack.c.bf16 %v506, %v506
        %v523 = vpack.c.bf16 %v508, %v508
        %v524 = vpack.c.bf16 %v511, %v511
        %v525 = vpack.c.bf16 %v513, %v513
        %v526 = vpack.c.bf16 %v516, %v516
        %v527 = vpack.c.bf16 %v518, %v518
        %v530 = vunpack.c.l.b16 %v407
        %v531 = vunpack.c.l.b16 %v408
        %v532 = vpack.c.b16 %v531, %v530
        %v535 = vunpack.c.l.b16 %v520
        %v536 = vunpack.c.l.b16 %v521
        %v537 = vpack.c.b16 %v536, %v535
        %v540 = vsel %vm443, %v532, 0
        %542 = vmatpush.bf16.msra.mxu0 0
        %543 = vmatpush.bf16.msra.mxu0 0
        %544 = vmatpush.bf16.msra.mxu0 0
        %545 = vmatpush.bf16.msra.mxu0 0
        %546 = vmatpush.bf16.msra.mxu0 0
        %547 = vmatpush.bf16.msra.mxu0 0
        %548 = vmatpush.bf16.msra.mxu0 0
        %549 = vmatpush.bf16.msra.mxu0 %v537
        %550 = vmatmul.bf16.gmra.mxu0 %v540
        %v551 = vpop.f32.mrf.mxu0
        %v552 = vadd.f32 0.0, %v551
        %v553 = vpop.f32.mrf.mxu0
        %v554 = vadd.f32 0.0, %v553
        %555 = vdwg.mxu0
        %v558 = vunpack.c.l.b16 %v522
        %v559 = vunpack.c.l.b16 %v523
        %v560 = vpack.c.b16 %v559, %v558
        %562 = vmatpush.bf16.msra.mxu0 0
        %563 = vmatpush.bf16.msra.mxu0 0
        %564 = vmatpush.bf16.msra.mxu0 0
        %565 = vmatpush.bf16.msra.mxu0 0
        %566 = vmatpush.bf16.msra.mxu0 0
        %567 = vmatpush.bf16.msra.mxu0 0
        %568 = vmatpush.bf16.msra.mxu0 0
        %569 = vmatpush.bf16.msra.mxu0 %v560
        %570 = vmatmul.bf16.gmra.mxu0 %v540
        %v571 = vpop.f32.mrf.mxu0
        %v572 = vadd.f32 0.0, %v571
        %v573 = vpop.f32.mrf.mxu0
        %v574 = vadd.f32 0.0, %v573
        %575 = vdwg.mxu0
        %v578 = vunpack.c.l.b16 %v524
        %v579 = vunpack.c.l.b16 %v525
        %v580 = vpack.c.b16 %v579, %v578
        %582 = vmatpush.bf16.msra.mxu0 0
        %583 = vmatpush.bf16.msra.mxu0 0
        %584 = vmatpush.bf16.msra.mxu0 0
        %585 = vmatpush.bf16.msra.mxu0 0
        %586 = vmatpush.bf16.msra.mxu0 0
        %587 = vmatpush.bf16.msra.mxu0 0
        %588 = vmatpush.bf16.msra.mxu0 0
        %589 = vmatpush.bf16.msra.mxu0 %v580
        %590 = vmatmul.bf16.gmra.mxu0 %v540
        %v591 = vpop.f32.mrf.mxu0
        %v592 = vadd.f32 0.0, %v591
        %v593 = vpop.f32.mrf.mxu0
        %v594 = vadd.f32 0.0, %v593
        %595 = vdwg.mxu0
        %v598 = vunpack.c.l.b16 %v526
        %v599 = vunpack.c.l.b16 %v527
        %v600 = vpack.c.b16 %v599, %v598
        %602 = vmatpush.bf16.msra.mxu0 0
        %603 = vmatpush.bf16.msra.mxu0 0
        %604 = vmatpush.bf16.msra.mxu0 0
        %605 = vmatpush.bf16.msra.mxu0 0
        %606 = vmatpush.bf16.msra.mxu0 0
        %607 = vmatpush.bf16.msra.mxu0 0
        %608 = vmatpush.bf16.msra.mxu0 0
        %609 = vmatpush.bf16.msra.mxu0 %v600
        %610 = vmatmul.bf16.gmra.mxu0 %v540
        %v611 = vpop.f32.mrf.mxu0
        %v612 = vadd.f32 0.0, %v611
        %v613 = vpop.f32.mrf.mxu0
        %v614 = vadd.f32 0.0, %v613
        %615 = vdwg.mxu0
        %v618 = vunpack.c.l.b16 %v405
        %v619 = vunpack.c.l.b16 %v406
        %v620 = vpack.c.b16 %v619, %v618
        %v622 = vsel %vm443, %v620, 0
        %624 = vmatpush.bf16.msra.mxu0 0
        %625 = vmatpush.bf16.msra.mxu0 0
        %626 = vmatpush.bf16.msra.mxu0 0
        %627 = vmatpush.bf16.msra.mxu0 0
        %628 = vmatpush.bf16.msra.mxu0 0
        %629 = vmatpush.bf16.msra.mxu0 0
        %630 = vmatpush.bf16.msra.mxu0 0
        %631 = vmatpush.bf16.msra.mxu0 %v537
        %632 = vmatmul.bf16.gmra.mxu0 %v622
        %v633 = vpop.f32.mrf.mxu0
        %v634 = vadd.f32 %v552, %v633
        %v635 = vpop.f32.mrf.mxu0
        %v636 = vadd.f32 %v554, %v635
        %637 = vdwg.mxu0
        %638 = vmatpush.bf16.msra.mxu0 0
        %639 = vmatpush.bf16.msra.mxu0 0
        %640 = vmatpush.bf16.msra.mxu0 0
        %641 = vmatpush.bf16.msra.mxu0 0
        %642 = vmatpush.bf16.msra.mxu0 0
        %643 = vmatpush.bf16.msra.mxu0 0
        %644 = vmatpush.bf16.msra.mxu0 0
        %645 = vmatpush.bf16.msra.mxu0 %v560
        %646 = vmatmul.bf16.gmra.mxu0 %v622
        %v647 = vpop.f32.mrf.mxu0
        %v648 = vadd.f32 %v572, %v647
        %v649 = vpop.f32.mrf.mxu0
        %v650 = vadd.f32 %v574, %v649
        %651 = vdwg.mxu0
        %652 = vmatpush.bf16.msra.mxu0 0
        %653 = vmatpush.bf16.msra.mxu0 0
        %654 = vmatpush.bf16.msra.mxu0 0
        %655 = vmatpush.bf16.msra.mxu0 0
        %656 = vmatpush.bf16.msra.mxu0 0
        %657 = vmatpush.bf16.msra.mxu0 0
        %658 = vmatpush.bf16.msra.mxu0 0
        %659 = vmatpush.bf16.msra.mxu0 %v580
        %660 = vmatmul.bf16.gmra.mxu0 %v622
        %v661 = vpop.f32.mrf.mxu0
        %v662 = vadd.f32 %v592, %v661
        %v663 = vpop.f32.mrf.mxu0
        %v664 = vadd.f32 %v594, %v663
        %665 = vdwg.mxu0
        %666 = vmatpush.bf16.msra.mxu0 0
        %667 = vmatpush.bf16.msra.mxu0 0
        %668 = vmatpush.bf16.msra.mxu0 0
        %669 = vmatpush.bf16.msra.mxu0 0
        %670 = vmatpush.bf16.msra.mxu0 0
        %671 = vmatpush.bf16.msra.mxu0 0
        %672 = vmatpush.bf16.msra.mxu0 0
        %673 = vmatpush.bf16.msra.mxu0 %v600
        %674 = vmatmul.bf16.gmra.mxu0 %v622
        %v675 = vpop.f32.mrf.mxu0
        %v676 = vadd.f32 %v612, %v675
        %v677 = vpop.f32.mrf.mxu0
        %v678 = vadd.f32 %v614, %v677
        %679 = vdwg.mxu0
        %v680 = vpack.c.bf16 %v393, %v393
        %v681 = vpack.c.bf16 %v394, %v394
        %v682 = vpack.c.bf16 %v395, %v395
        %v683 = vpack.c.bf16 %v396, %v396
        %v684 = vpack.c.bf16 %v397, %v397
        %v685 = vpack.c.bf16 %v398, %v398
        %v686 = vpack.c.bf16 %v399, %v399
        %v687 = vpack.c.bf16 %v400, %v400
        %v696 = vunpack.c.l.b16 %v680
        %v697 = vunpack.c.l.b16 %v681
        %v698 = vunpack.c.l.b16 %v682
        %v699 = vunpack.c.l.b16 %v683
        %v700 = vunpack.c.l.b16 %v684
        %v701 = vunpack.c.l.b16 %v685
        %v702 = vunpack.c.l.b16 %v686
        %v703 = vunpack.c.l.b16 %v687
        %v704 = vpack.c.b16 %v697, %v696
        %v705 = vpack.c.b16 %v699, %v698
        %v706 = vpack.c.b16 %v701, %v700
        %v707 = vpack.c.b16 %v703, %v702
        %v709 = vsel %vm443, %v704, 0
        %v712 = vsel %vm443, %v705, 0
        %v715 = vsel %vm443, %v706, 0
        %v718 = vsel %vm443, %v707, 0
        %720 = vmatpush.bf16.msra.mxu0 0
        %721 = vmatpush.bf16.msra.mxu0 0
        %722 = vmatpush.bf16.msra.mxu0 0
        %723 = vmatpush.bf16.msra.mxu0 0
        %724 = vmatpush.bf16.msra.mxu0 0
        %725 = vmatpush.bf16.msra.mxu0 0
        %726 = vmatpush.bf16.msra.mxu0 0
        %727 = vmatpush.bf16.msra.mxu0 %v441
        %728 = vmatmul.bf16.gmra.mxu0 %v709
        %v729 = vpop.f32.mrf.mxu0
        %v730 = vadd.f32 0.0, %v729
        %v731 = vpop.f32.mrf.mxu0
        %v732 = vadd.f32 0.0, %v731
        %733 = vmatmul.bf16.gmra.mxu0 %v712
        %v734 = vpop.f32.mrf.mxu0
        %v735 = vadd.f32 0.0, %v734
        %v736 = vpop.f32.mrf.mxu0
        %v737 = vadd.f32 0.0, %v736
        %738 = vmatmul.bf16.gmra.mxu0 %v715
        %v739 = vpop.f32.mrf.mxu0
        %v740 = vadd.f32 0.0, %v739
        %v741 = vpop.f32.mrf.mxu0
        %v742 = vadd.f32 0.0, %v741
        %743 = vmatmul.bf16.gmra.mxu0 %v718
        %v744 = vpop.f32.mrf.mxu0
        %v745 = vadd.f32 0.0, %v744
        %v746 = vpop.f32.mrf.mxu0
        %v747 = vadd.f32 0.0, %v746
        %748 = vdwg.mxu0
        %749 = vmatpush.bf16.msra.mxu0 0
        %750 = vmatpush.bf16.msra.mxu0 0
        %751 = vmatpush.bf16.msra.mxu0 0
        %752 = vmatpush.bf16.msra.mxu0 0
        %753 = vmatpush.bf16.msra.mxu0 0
        %754 = vmatpush.bf16.msra.mxu0 0
        %755 = vmatpush.bf16.msra.mxu0 0
        %756 = vmatpush.bf16.msra.mxu0 %v489
        %757 = vmatmul.bf16.gmra.mxu0 %v709
        %v758 = vpop.f32.mrf.mxu0
        %v759 = vadd.f32 %v730, %v758
        %v760 = vpop.f32.mrf.mxu0
        %v761 = vadd.f32 %v732, %v760
        %762 = vmatmul.bf16.gmra.mxu0 %v712
        %v763 = vpop.f32.mrf.mxu0
        %v764 = vadd.f32 %v735, %v763
        %v765 = vpop.f32.mrf.mxu0
        %v766 = vadd.f32 %v737, %v765
        %767 = vmatmul.bf16.gmra.mxu0 %v715
        %v768 = vpop.f32.mrf.mxu0
        %v769 = vadd.f32 %v740, %v768
        %v770 = vpop.f32.mrf.mxu0
        %v771 = vadd.f32 %v742, %v770
        %772 = vmatmul.bf16.gmra.mxu0 %v718
        %v773 = vpop.f32.mrf.mxu0
        %v774 = vadd.f32 %v745, %v773
        %v775 = vpop.f32.mrf.mxu0
        %v776 = vadd.f32 %v747, %v775
        %777 = vdwg.mxu0
        %v778 = vpack.c.bf16 %v759, %v759
        %v779 = vpack.c.bf16 %v761, %v761
        %v780 = vpack.c.bf16 %v764, %v764
        %v781 = vpack.c.bf16 %v766, %v766
        %v782 = vpack.c.bf16 %v769, %v769
        %v783 = vpack.c.bf16 %v771, %v771
        %v784 = vpack.c.bf16 %v774, %v774
        %v785 = vpack.c.bf16 %v776, %v776
        %v788 = vunpack.c.l.b16 %v778
        %v789 = vunpack.c.l.b16 %v779
        %v790 = vpack.c.b16 %v789, %v788
        %792 = vmatpush.bf16.msra.mxu0 0
        %793 = vmatpush.bf16.msra.mxu0 0
        %794 = vmatpush.bf16.msra.mxu0 0
        %795 = vmatpush.bf16.msra.mxu0 0
        %796 = vmatpush.bf16.msra.mxu0 0
        %797 = vmatpush.bf16.msra.mxu0 0
        %798 = vmatpush.bf16.msra.mxu0 0
        %799 = vmatpush.bf16.msra.mxu0 %v790
        %800 = vmatmul.bf16.gmra.mxu0 %v540
        %v801 = vpop.f32.mrf.mxu0
        %v802 = vadd.f32 0.0, %v801
        %v803 = vpop.f32.mrf.mxu0
        %v804 = vadd.f32 0.0, %v803
        %805 = vdwg.mxu0
        %v808 = vunpack.c.l.b16 %v780
        %v809 = vunpack.c.l.b16 %v781
        %v810 = vpack.c.b16 %v809, %v808
        %812 = vmatpush.bf16.msra.mxu0 0
        %813 = vmatpush.bf16.msra.mxu0 0
        %814 = vmatpush.bf16.msra.mxu0 0
        %815 = vmatpush.bf16.msra.mxu0 0
        %816 = vmatpush.bf16.msra.mxu0 0
        %817 = vmatpush.bf16.msra.mxu0 0
        %818 = vmatpush.bf16.msra.mxu0 0
        %819 = vmatpush.bf16.msra.mxu0 %v810
        %820 = vmatmul.bf16.gmra.mxu0 %v540
        %v821 = vpop.f32.mrf.mxu0
        %v822 = vadd.f32 0.0, %v821
        %v823 = vpop.f32.mrf.mxu0
        %v824 = vadd.f32 0.0, %v823
        %825 = vdwg.mxu0
        %v828 = vunpack.c.l.b16 %v782
        %v829 = vunpack.c.l.b16 %v783
        %v830 = vpack.c.b16 %v829, %v828
        %832 = vmatpush.bf16.msra.mxu0 0
        %833 = vmatpush.bf16.msra.mxu0 0
        %834 = vmatpush.bf16.msra.mxu0 0
        %835 = vmatpush.bf16.msra.mxu0 0
        %836 = vmatpush.bf16.msra.mxu0 0
        %837 = vmatpush.bf16.msra.mxu0 0
        %838 = vmatpush.bf16.msra.mxu0 0
        %839 = vmatpush.bf16.msra.mxu0 %v830
        %840 = vmatmul.bf16.gmra.mxu0 %v540
        %v841 = vpop.f32.mrf.mxu0
        %v842 = vadd.f32 0.0, %v841
        %v843 = vpop.f32.mrf.mxu0
        %v844 = vadd.f32 0.0, %v843
        %845 = vdwg.mxu0
        %v848 = vunpack.c.l.b16 %v784
        %v849 = vunpack.c.l.b16 %v785
        %v850 = vpack.c.b16 %v849, %v848
        %852 = vmatpush.bf16.msra.mxu0 0
        %853 = vmatpush.bf16.msra.mxu0 0
        %854 = vmatpush.bf16.msra.mxu0 0
        %855 = vmatpush.bf16.msra.mxu0 0
        %856 = vmatpush.bf16.msra.mxu0 0
        %857 = vmatpush.bf16.msra.mxu0 0
        %858 = vmatpush.bf16.msra.mxu0 0
        %859 = vmatpush.bf16.msra.mxu0 %v850
        %860 = vmatmul.bf16.gmra.mxu0 %v540
        %v861 = vpop.f32.mrf.mxu0
        %v862 = vadd.f32 0.0, %v861
        %v863 = vpop.f32.mrf.mxu0
        %v864 = vadd.f32 0.0, %v863
        %865 = vdwg.mxu0
        %866 = vmatpush.bf16.msra.mxu0 0
        %867 = vmatpush.bf16.msra.mxu0 0
        %868 = vmatpush.bf16.msra.mxu0 0
        %869 = vmatpush.bf16.msra.mxu0 0
        %870 = vmatpush.bf16.msra.mxu0 0
        %871 = vmatpush.bf16.msra.mxu0 0
        %872 = vmatpush.bf16.msra.mxu0 0
        %873 = vmatpush.bf16.msra.mxu0 %v790
        %874 = vmatmul.bf16.gmra.mxu0 %v622
        %v875 = vpop.f32.mrf.mxu0
        %v876 = vadd.f32 %v802, %v875
        %v877 = vpop.f32.mrf.mxu0
        %v878 = vadd.f32 %v804, %v877
        %879 = vdwg.mxu0
        %880 = vmatpush.bf16.msra.mxu0 0
        %881 = vmatpush.bf16.msra.mxu0 0
        %882 = vmatpush.bf16.msra.mxu0 0
        %883 = vmatpush.bf16.msra.mxu0 0
        %884 = vmatpush.bf16.msra.mxu0 0
        %885 = vmatpush.bf16.msra.mxu0 0
        %886 = vmatpush.bf16.msra.mxu0 0
        %887 = vmatpush.bf16.msra.mxu0 %v810
        %888 = vmatmul.bf16.gmra.mxu0 %v622
        %v889 = vpop.f32.mrf.mxu0
        %v890 = vadd.f32 %v822, %v889
        %v891 = vpop.f32.mrf.mxu0
        %v892 = vadd.f32 %v824, %v891
        %893 = vdwg.mxu0
        %894 = vmatpush.bf16.msra.mxu0 0
        %895 = vmatpush.bf16.msra.mxu0 0
        %896 = vmatpush.bf16.msra.mxu0 0
        %897 = vmatpush.bf16.msra.mxu0 0
        %898 = vmatpush.bf16.msra.mxu0 0
        %899 = vmatpush.bf16.msra.mxu0 0
        %900 = vmatpush.bf16.msra.mxu0 0
        %901 = vmatpush.bf16.msra.mxu0 %v830
        %902 = vmatmul.bf16.gmra.mxu0 %v622
        %v903 = vpop.f32.mrf.mxu0
        %v904 = vadd.f32 %v842, %v903
        %v905 = vpop.f32.mrf.mxu0
        %v906 = vadd.f32 %v844, %v905
        %907 = vdwg.mxu0
        %908 = vmatpush.bf16.msra.mxu0 0
        %909 = vmatpush.bf16.msra.mxu0 0
        %910 = vmatpush.bf16.msra.mxu0 0
        %911 = vmatpush.bf16.msra.mxu0 0
        %912 = vmatpush.bf16.msra.mxu0 0
        %913 = vmatpush.bf16.msra.mxu0 0
        %914 = vmatpush.bf16.msra.mxu0 0
        %915 = vmatpush.bf16.msra.mxu0 %v850
        %916 = vmatmul.bf16.gmra.mxu0 %v622
        %v917 = vpop.f32.mrf.mxu0
        %v918 = vadd.f32 %v862, %v917
        %v919 = vpop.f32.mrf.mxu0
        %v920 = vadd.f32 %v864, %v919
        %921 = vdwg.mxu0
        %v922 = vmul.f32 %v385, %v385
        %v923 = vmul.f32 %v386, %v386
        %v924 = vmul.f32 %v387, %v387
        %v925 = vmul.f32 %v388, %v388
        %v926 = vmul.f32 %v389, %v389
        %v927 = vmul.f32 %v390, %v390
        %v928 = vmul.f32 %v391, %v391
        %v929 = vmul.f32 %v392, %v392
        %v930 = vpack.c.bf16 %v922, %v922
        %v931 = vpack.c.bf16 %v923, %v923
        %v932 = vpack.c.bf16 %v924, %v924
        %v933 = vpack.c.bf16 %v925, %v925
        %v934 = vpack.c.bf16 %v926, %v926
        %v935 = vpack.c.bf16 %v927, %v927
        %v936 = vpack.c.bf16 %v928, %v928
        %v937 = vpack.c.bf16 %v929, %v929
        %v946 = vunpack.c.l.b16 %v930
        %v947 = vunpack.c.l.b16 %v931
        %v948 = vunpack.c.l.b16 %v932
        %v949 = vunpack.c.l.b16 %v933
        %v950 = vunpack.c.l.b16 %v934
        %v951 = vunpack.c.l.b16 %v935
        %v952 = vunpack.c.l.b16 %v936
        %v953 = vunpack.c.l.b16 %v937
        %v954 = vpack.c.b16 %v947, %v946
        %v955 = vpack.c.b16 %v949, %v948
        %v956 = vpack.c.b16 %v951, %v950
        %v957 = vpack.c.b16 %v953, %v952
        %v959 = vsel %vm443, %v954, 0
        %v962 = vsel %vm443, %v955, 0
        %v965 = vsel %vm443, %v956, 0
        %v968 = vsel %vm443, %v957, 0
        %970 = vmatpush.bf16.msra.mxu0 0
        %971 = vmatpush.bf16.msra.mxu0 0
        %972 = vmatpush.bf16.msra.mxu0 0
        %973 = vmatpush.bf16.msra.mxu0 0
        %974 = vmatpush.bf16.msra.mxu0 0
        %975 = vmatpush.bf16.msra.mxu0 0
        %976 = vmatpush.bf16.msra.mxu0 0
        %977 = vmatpush.bf16.msra.mxu0 %v441
        %978 = vmatmul.bf16.gmra.mxu0 %v959
        %v979 = vpop.f32.mrf.mxu0
        %v980 = vadd.f32 0.0, %v979
        %v981 = vpop.f32.mrf.mxu0
        %v982 = vadd.f32 0.0, %v981
        %983 = vmatmul.bf16.gmra.mxu0 %v962
        %v984 = vpop.f32.mrf.mxu0
        %v985 = vadd.f32 0.0, %v984
        %v986 = vpop.f32.mrf.mxu0
        %v987 = vadd.f32 0.0, %v986
        %988 = vmatmul.bf16.gmra.mxu0 %v965
        %v989 = vpop.f32.mrf.mxu0
        %v990 = vadd.f32 0.0, %v989
        %v991 = vpop.f32.mrf.mxu0
        %v992 = vadd.f32 0.0, %v991
        %993 = vmatmul.bf16.gmra.mxu0 %v968
        %v994 = vpop.f32.mrf.mxu0
        %v995 = vadd.f32 0.0, %v994
        %v996 = vpop.f32.mrf.mxu0
        %v997 = vadd.f32 0.0, %v996
        %998 = vdwg.mxu0
        %999 = vmatpush.bf16.msra.mxu0 0
        %1000 = vmatpush.bf16.msra.mxu0 0
        %1001 = vmatpush.bf16.msra.mxu0 0
        %1002 = vmatpush.bf16.msra.mxu0 0
        %1003 = vmatpush.bf16.msra.mxu0 0
        %1004 = vmatpush.bf16.msra.mxu0 0
        %1005 = vmatpush.bf16.msra.mxu0 0
        %1006 = vmatpush.bf16.msra.mxu0 %v489
        %1007 = vmatmul.bf16.gmra.mxu0 %v959
        %v1008 = vpop.f32.mrf.mxu0
        %v1009 = vadd.f32 %v980, %v1008
        %v1010 = vpop.f32.mrf.mxu0
        %v1011 = vadd.f32 %v982, %v1010
        %1012 = vmatmul.bf16.gmra.mxu0 %v962
        %v1013 = vpop.f32.mrf.mxu0
        %v1014 = vadd.f32 %v985, %v1013
        %v1015 = vpop.f32.mrf.mxu0
        %v1016 = vadd.f32 %v987, %v1015
        %1017 = vmatmul.bf16.gmra.mxu0 %v965
        %v1018 = vpop.f32.mrf.mxu0
        %v1019 = vadd.f32 %v990, %v1018
        %v1020 = vpop.f32.mrf.mxu0
        %v1021 = vadd.f32 %v992, %v1020
        %1022 = vmatmul.bf16.gmra.mxu0 %v968
        %v1023 = vpop.f32.mrf.mxu0
        %v1024 = vadd.f32 %v995, %v1023
        %v1025 = vpop.f32.mrf.mxu0
        %v1026 = vadd.f32 %v997, %v1025
        %1027 = vdwg.mxu0
        %v1028 = vpack.c.bf16 %v1009, %v1009
        %v1029 = vpack.c.bf16 %v1011, %v1011
        %v1030 = vpack.c.bf16 %v1014, %v1014
        %v1031 = vpack.c.bf16 %v1016, %v1016
        %v1032 = vpack.c.bf16 %v1019, %v1019
        %v1033 = vpack.c.bf16 %v1021, %v1021
        %v1034 = vpack.c.bf16 %v1024, %v1024
        %v1035 = vpack.c.bf16 %v1026, %v1026
        %v1038 = vunpack.c.l.b16 %v1028
        %v1039 = vunpack.c.l.b16 %v1029
        %v1040 = vpack.c.b16 %v1039, %v1038
        %1042 = vmatpush.bf16.msra.mxu0 0
        %1043 = vmatpush.bf16.msra.mxu0 0
        %1044 = vmatpush.bf16.msra.mxu0 0
        %1045 = vmatpush.bf16.msra.mxu0 0
        %1046 = vmatpush.bf16.msra.mxu0 0
        %1047 = vmatpush.bf16.msra.mxu0 0
        %1048 = vmatpush.bf16.msra.mxu0 0
        %1049 = vmatpush.bf16.msra.mxu0 %v1040
        %1050 = vmatmul.bf16.gmra.mxu0 %v540
        %v1051 = vpop.f32.mrf.mxu0
        %v1052 = vadd.f32 0.0, %v1051
        %v1053 = vpop.f32.mrf.mxu0
        %v1054 = vadd.f32 0.0, %v1053
        %1055 = vdwg.mxu0
        %v1058 = vunpack.c.l.b16 %v1030
        %v1059 = vunpack.c.l.b16 %v1031
        %v1060 = vpack.c.b16 %v1059, %v1058
        %1062 = vmatpush.bf16.msra.mxu0 0
        %1063 = vmatpush.bf16.msra.mxu0 0
        %1064 = vmatpush.bf16.msra.mxu0 0
        %1065 = vmatpush.bf16.msra.mxu0 0
        %1066 = vmatpush.bf16.msra.mxu0 0
        %1067 = vmatpush.bf16.msra.mxu0 0
        %1068 = vmatpush.bf16.msra.mxu0 0
        %1069 = vmatpush.bf16.msra.mxu0 %v1060
        %1070 = vmatmul.bf16.gmra.mxu0 %v540
        %v1071 = vpop.f32.mrf.mxu0
        %v1072 = vadd.f32 0.0, %v1071
        %v1073 = vpop.f32.mrf.mxu0
        %v1074 = vadd.f32 0.0, %v1073
        %1075 = vdwg.mxu0
        %v1078 = vunpack.c.l.b16 %v1032
        %v1079 = vunpack.c.l.b16 %v1033
        %v1080 = vpack.c.b16 %v1079, %v1078
        %1082 = vmatpush.bf16.msra.mxu0 0
        %1083 = vmatpush.bf16.msra.mxu0 0
        %1084 = vmatpush.bf16.msra.mxu0 0
        %1085 = vmatpush.bf16.msra.mxu0 0
        %1086 = vmatpush.bf16.msra.mxu0 0
        %1087 = vmatpush.bf16.msra.mxu0 0
        %1088 = vmatpush.bf16.msra.mxu0 0
        %1089 = vmatpush.bf16.msra.mxu0 %v1080
        %1090 = vmatmul.bf16.gmra.mxu0 %v540
        %v1091 = vpop.f32.mrf.mxu0
        %v1092 = vadd.f32 0.0, %v1091
        %v1093 = vpop.f32.mrf.mxu0
        %v1094 = vadd.f32 0.0, %v1093
        %1095 = vdwg.mxu0
        %v1098 = vunpack.c.l.b16 %v1034
        %v1099 = vunpack.c.l.b16 %v1035
        %v1100 = vpack.c.b16 %v1099, %v1098
        %1102 = vmatpush.bf16.msra.mxu0 0
        %1103 = vmatpush.bf16.msra.mxu0 0
        %1104 = vmatpush.bf16.msra.mxu0 0
        %1105 = vmatpush.bf16.msra.mxu0 0
        %1106 = vmatpush.bf16.msra.mxu0 0
        %1107 = vmatpush.bf16.msra.mxu0 0
        %1108 = vmatpush.bf16.msra.mxu0 0
        %1109 = vmatpush.bf16.msra.mxu0 %v1100
        %1110 = vmatmul.bf16.gmra.mxu0 %v540
        %v1111 = vpop.f32.mrf.mxu0
        %v1112 = vadd.f32 0.0, %v1111
        %v1113 = vpop.f32.mrf.mxu0
        %v1114 = vadd.f32 0.0, %v1113
        %1115 = vdwg.mxu0
        %1116 = vmatpush.bf16.msra.mxu0 0
        %1117 = vmatpush.bf16.msra.mxu0 0
        %1118 = vmatpush.bf16.msra.mxu0 0
        %1119 = vmatpush.bf16.msra.mxu0 0
        %1120 = vmatpush.bf16.msra.mxu0 0
        %1121 = vmatpush.bf16.msra.mxu0 0
        %1122 = vmatpush.bf16.msra.mxu0 0
        %1123 = vmatpush.bf16.msra.mxu0 %v1040
        %1124 = vmatmul.bf16.gmra.mxu0 %v622
        %v1125 = vpop.f32.mrf.mxu0
        %v1126 = vadd.f32 %v1052, %v1125
        %v1127 = vpop.f32.mrf.mxu0
        %v1128 = vadd.f32 %v1054, %v1127
        %1129 = vdwg.mxu0
        %1130 = vmatpush.bf16.msra.mxu0 0
        %1131 = vmatpush.bf16.msra.mxu0 0
        %1132 = vmatpush.bf16.msra.mxu0 0
        %1133 = vmatpush.bf16.msra.mxu0 0
        %1134 = vmatpush.bf16.msra.mxu0 0
        %1135 = vmatpush.bf16.msra.mxu0 0
        %1136 = vmatpush.bf16.msra.mxu0 0
        %1137 = vmatpush.bf16.msra.mxu0 %v1060
        %1138 = vmatmul.bf16.gmra.mxu0 %v622
        %v1139 = vpop.f32.mrf.mxu0
        %v1140 = vadd.f32 %v1072, %v1139
        %v1141 = vpop.f32.mrf.mxu0
        %v1142 = vadd.f32 %v1074, %v1141
        %1143 = vdwg.mxu0
        %1144 = vmatpush.bf16.msra.mxu0 0
        %1145 = vmatpush.bf16.msra.mxu0 0
        %1146 = vmatpush.bf16.msra.mxu0 0
        %1147 = vmatpush.bf16.msra.mxu0 0
        %1148 = vmatpush.bf16.msra.mxu0 0
        %1149 = vmatpush.bf16.msra.mxu0 0
        %1150 = vmatpush.bf16.msra.mxu0 0
        %1151 = vmatpush.bf16.msra.mxu0 %v1080
        %1152 = vmatmul.bf16.gmra.mxu0 %v622
        %v1153 = vpop.f32.mrf.mxu0
        %v1154 = vadd.f32 %v1092, %v1153
        %v1155 = vpop.f32.mrf.mxu0
        %v1156 = vadd.f32 %v1094, %v1155
        %1157 = vdwg.mxu0
        %1158 = vmatpush.bf16.msra.mxu0 0
        %1159 = vmatpush.bf16.msra.mxu0 0
        %1160 = vmatpush.bf16.msra.mxu0 0
        %1161 = vmatpush.bf16.msra.mxu0 0
        %1162 = vmatpush.bf16.msra.mxu0 0
        %1163 = vmatpush.bf16.msra.mxu0 0
        %1164 = vmatpush.bf16.msra.mxu0 0
        %1165 = vmatpush.bf16.msra.mxu0 %v1100
        %1166 = vmatmul.bf16.gmra.mxu0 %v622
        %v1167 = vpop.f32.mrf.mxu0
        %v1168 = vadd.f32 %v1112, %v1167
        %v1169 = vpop.f32.mrf.mxu0
        %v1170 = vadd.f32 %v1114, %v1169
        %1171 = vdwg.mxu0
        %v1172 = vmul.f32 %v393, %v393
        %v1173 = vmul.f32 %v394, %v394
        %v1174 = vmul.f32 %v395, %v395
        %v1175 = vmul.f32 %v396, %v396
        %v1176 = vmul.f32 %v397, %v397
        %v1177 = vmul.f32 %v398, %v398
        %v1178 = vmul.f32 %v399, %v399
        %v1179 = vmul.f32 %v400, %v400
        %v1180 = vpack.c.bf16 %v1172, %v1172
        %v1181 = vpack.c.bf16 %v1173, %v1173
        %v1182 = vpack.c.bf16 %v1174, %v1174
        %v1183 = vpack.c.bf16 %v1175, %v1175
        %v1184 = vpack.c.bf16 %v1176, %v1176
        %v1185 = vpack.c.bf16 %v1177, %v1177
        %v1186 = vpack.c.bf16 %v1178, %v1178
        %v1187 = vpack.c.bf16 %v1179, %v1179
        %v1196 = vunpack.c.l.b16 %v1180
        %v1197 = vunpack.c.l.b16 %v1181
        %v1198 = vunpack.c.l.b16 %v1182
        %v1199 = vunpack.c.l.b16 %v1183
        %v1200 = vunpack.c.l.b16 %v1184
        %v1201 = vunpack.c.l.b16 %v1185
        %v1202 = vunpack.c.l.b16 %v1186
        %v1203 = vunpack.c.l.b16 %v1187
        %v1204 = vpack.c.b16 %v1197, %v1196
        %v1205 = vpack.c.b16 %v1199, %v1198
        %v1206 = vpack.c.b16 %v1201, %v1200
        %v1207 = vpack.c.b16 %v1203, %v1202
        %v1209 = vsel %vm443, %v1204, 0
        %v1212 = vsel %vm443, %v1205, 0
        %v1215 = vsel %vm443, %v1206, 0
        %v1218 = vsel %vm443, %v1207, 0
        %1220 = vmatpush.bf16.msra.mxu0 0
        %1221 = vmatpush.bf16.msra.mxu0 0
        %1222 = vmatpush.bf16.msra.mxu0 0
        %1223 = vmatpush.bf16.msra.mxu0 0
        %1224 = vmatpush.bf16.msra.mxu0 0
        %1225 = vmatpush.bf16.msra.mxu0 0
        %1226 = vmatpush.bf16.msra.mxu0 0
        %1227 = vmatpush.bf16.msra.mxu0 %v441
        %1228 = vmatmul.bf16.gmra.mxu0 %v1209
        %v1229 = vpop.f32.mrf.mxu0
        %v1230 = vadd.f32 0.0, %v1229
        %v1231 = vpop.f32.mrf.mxu0
        %v1232 = vadd.f32 0.0, %v1231
        %1233 = vmatmul.bf16.gmra.mxu0 %v1212
        %v1234 = vpop.f32.mrf.mxu0
        %v1235 = vadd.f32 0.0, %v1234
        %v1236 = vpop.f32.mrf.mxu0
        %v1237 = vadd.f32 0.0, %v1236
        %1238 = vmatmul.bf16.gmra.mxu0 %v1215
        %v1239 = vpop.f32.mrf.mxu0
        %v1240 = vadd.f32 0.0, %v1239
        %v1241 = vpop.f32.mrf.mxu0
        %v1242 = vadd.f32 0.0, %v1241
        %1243 = vmatmul.bf16.gmra.mxu0 %v1218
        %v1244 = vpop.f32.mrf.mxu0
        %v1245 = vadd.f32 0.0, %v1244
        %v1246 = vpop.f32.mrf.mxu0
        %v1247 = vadd.f32 0.0, %v1246
        %1248 = vdwg.mxu0
        %1249 = vmatpush.bf16.msra.mxu0 0
        %1250 = vmatpush.bf16.msra.mxu0 0
        %1251 = vmatpush.bf16.msra.mxu0 0
        %1252 = vmatpush.bf16.msra.mxu0 0
        %1253 = vmatpush.bf16.msra.mxu0 0
        %1254 = vmatpush.bf16.msra.mxu0 0
        %1255 = vmatpush.bf16.msra.mxu0 0
        %1256 = vmatpush.bf16.msra.mxu0 %v489
        %1257 = vmatmul.bf16.gmra.mxu0 %v1209
        %v1258 = vpop.f32.mrf.mxu0
        %v1259 = vadd.f32 %v1230, %v1258
        %v1260 = vpop.f32.mrf.mxu0
        %v1261 = vadd.f32 %v1232, %v1260
        %1262 = vmatmul.bf16.gmra.mxu0 %v1212
        %v1263 = vpop.f32.mrf.mxu0
        %v1264 = vadd.f32 %v1235, %v1263
        %v1265 = vpop.f32.mrf.mxu0
        %v1266 = vadd.f32 %v1237, %v1265
        %1267 = vmatmul.bf16.gmra.mxu0 %v1215
        %v1268 = vpop.f32.mrf.mxu0
        %v1269 = vadd.f32 %v1240, %v1268
        %v1270 = vpop.f32.mrf.mxu0
        %v1271 = vadd.f32 %v1242, %v1270
        %1272 = vmatmul.bf16.gmra.mxu0 %v1218
        %v1273 = vpop.f32.mrf.mxu0
        %v1274 = vadd.f32 %v1245, %v1273
        %v1275 = vpop.f32.mrf.mxu0
        %v1276 = vadd.f32 %v1247, %v1275
        %1277 = vdwg.mxu0
        %v1278 = vpack.c.bf16 %v1259, %v1259
        %v1279 = vpack.c.bf16 %v1261, %v1261
        %v1280 = vpack.c.bf16 %v1264, %v1264
        %v1281 = vpack.c.bf16 %v1266, %v1266
        %v1282 = vpack.c.bf16 %v1269, %v1269
        %v1283 = vpack.c.bf16 %v1271, %v1271
        %v1284 = vpack.c.bf16 %v1274, %v1274
        %v1285 = vpack.c.bf16 %v1276, %v1276
        %v1288 = vunpack.c.l.b16 %v1278
        %v1289 = vunpack.c.l.b16 %v1279
        %v1290 = vpack.c.b16 %v1289, %v1288
        %1292 = vmatpush.bf16.msra.mxu0 0
        %1293 = vmatpush.bf16.msra.mxu0 0
        %1294 = vmatpush.bf16.msra.mxu0 0
        %1295 = vmatpush.bf16.msra.mxu0 0
        %1296 = vmatpush.bf16.msra.mxu0 0
        %1297 = vmatpush.bf16.msra.mxu0 0
        %1298 = vmatpush.bf16.msra.mxu0 0
        %1299 = vmatpush.bf16.msra.mxu0 %v1290
        %1300 = vmatmul.bf16.gmra.mxu0 %v540
        %v1301 = vpop.f32.mrf.mxu0
        %v1302 = vadd.f32 0.0, %v1301
        %v1303 = vpop.f32.mrf.mxu0
        %v1304 = vadd.f32 0.0, %v1303
        %1305 = vdwg.mxu0
        %v1308 = vunpack.c.l.b16 %v1280
        %v1309 = vunpack.c.l.b16 %v1281
        %v1310 = vpack.c.b16 %v1309, %v1308
        %1312 = vmatpush.bf16.msra.mxu0 0
        %1313 = vmatpush.bf16.msra.mxu0 0
        %1314 = vmatpush.bf16.msra.mxu0 0
        %1315 = vmatpush.bf16.msra.mxu0 0
        %1316 = vmatpush.bf16.msra.mxu0 0
        %1317 = vmatpush.bf16.msra.mxu0 0
        %1318 = vmatpush.bf16.msra.mxu0 0
        %1319 = vmatpush.bf16.msra.mxu0 %v1310
        %1320 = vmatmul.bf16.gmra.mxu0 %v540
        %v1321 = vpop.f32.mrf.mxu0
        %v1322 = vadd.f32 0.0, %v1321
        %v1323 = vpop.f32.mrf.mxu0
        %v1324 = vadd.f32 0.0, %v1323
        %1325 = vdwg.mxu0
        %v1328 = vunpack.c.l.b16 %v1282
        %v1329 = vunpack.c.l.b16 %v1283
        %v1330 = vpack.c.b16 %v1329, %v1328
        %1332 = vmatpush.bf16.msra.mxu0 0
        %1333 = vmatpush.bf16.msra.mxu0 0
        %1334 = vmatpush.bf16.msra.mxu0 0
        %1335 = vmatpush.bf16.msra.mxu0 0
        %1336 = vmatpush.bf16.msra.mxu0 0
        %1337 = vmatpush.bf16.msra.mxu0 0
        %1338 = vmatpush.bf16.msra.mxu0 0
        %1339 = vmatpush.bf16.msra.mxu0 %v1330
        %1340 = vmatmul.bf16.gmra.mxu0 %v540
        %v1341 = vpop.f32.mrf.mxu0
        %v1342 = vadd.f32 0.0, %v1341
        %v1343 = vpop.f32.mrf.mxu0
        %v1344 = vadd.f32 0.0, %v1343
        %1345 = vdwg.mxu0
        %v1348 = vunpack.c.l.b16 %v1284
        %v1349 = vunpack.c.l.b16 %v1285
        %v1350 = vpack.c.b16 %v1349, %v1348
        %1352 = vmatpush.bf16.msra.mxu0 0
        %1353 = vmatpush.bf16.msra.mxu0 0
        %1354 = vmatpush.bf16.msra.mxu0 0
        %1355 = vmatpush.bf16.msra.mxu0 0
        %1356 = vmatpush.bf16.msra.mxu0 0
        %1357 = vmatpush.bf16.msra.mxu0 0
        %1358 = vmatpush.bf16.msra.mxu0 0
        %1359 = vmatpush.bf16.msra.mxu0 %v1350
        %1360 = vmatmul.bf16.gmra.mxu0 %v540
        %v1361 = vpop.f32.mrf.mxu0
        %v1362 = vadd.f32 0.0, %v1361
        %v1363 = vpop.f32.mrf.mxu0
        %v1364 = vadd.f32 0.0, %v1363
        %1365 = vdwg.mxu0
        %1366 = vmatpush.bf16.msra.mxu0 0
        %1367 = vmatpush.bf16.msra.mxu0 0
        %1368 = vmatpush.bf16.msra.mxu0 0
        %1369 = vmatpush.bf16.msra.mxu0 0
        %1370 = vmatpush.bf16.msra.mxu0 0
        %1371 = vmatpush.bf16.msra.mxu0 0
        %1372 = vmatpush.bf16.msra.mxu0 0
        %1373 = vmatpush.bf16.msra.mxu0 %v1290
        %1374 = vmatmul.bf16.gmra.mxu0 %v622
        %v1375 = vpop.f32.mrf.mxu0
        %v1376 = vadd.f32 %v1302, %v1375
        %v1377 = vpop.f32.mrf.mxu0
        %v1378 = vadd.f32 %v1304, %v1377
        %1379 = vdwg.mxu0
        %1380 = vmatpush.bf16.msra.mxu0 0
        %1381 = vmatpush.bf16.msra.mxu0 0
        %1382 = vmatpush.bf16.msra.mxu0 0
        %1383 = vmatpush.bf16.msra.mxu0 0
        %1384 = vmatpush.bf16.msra.mxu0 0
        %1385 = vmatpush.bf16.msra.mxu0 0
        %1386 = vmatpush.bf16.msra.mxu0 0
        %1387 = vmatpush.bf16.msra.mxu0 %v1310
        %1388 = vmatmul.bf16.gmra.mxu0 %v622
        %v1389 = vpop.f32.mrf.mxu0
        %v1390 = vadd.f32 %v1322, %v1389
        %v1391 = vpop.f32.mrf.mxu0
        %v1392 = vadd.f32 %v1324, %v1391
        %1393 = vdwg.mxu0
        %1394 = vmatpush.bf16.msra.mxu0 0
        %1395 = vmatpush.bf16.msra.mxu0 0
        %1396 = vmatpush.bf16.msra.mxu0 0
        %1397 = vmatpush.bf16.msra.mxu0 0
        %1398 = vmatpush.bf16.msra.mxu0 0
        %1399 = vmatpush.bf16.msra.mxu0 0
        %1400 = vmatpush.bf16.msra.mxu0 0
        %1401 = vmatpush.bf16.msra.mxu0 %v1330
        %1402 = vmatmul.bf16.gmra.mxu0 %v622
        %v1403 = vpop.f32.mrf.mxu0
        %v1404 = vadd.f32 %v1342, %v1403
        %v1405 = vpop.f32.mrf.mxu0
        %v1406 = vadd.f32 %v1344, %v1405
        %1407 = vdwg.mxu0
        %1408 = vmatpush.bf16.msra.mxu0 0
        %1409 = vmatpush.bf16.msra.mxu0 0
        %1410 = vmatpush.bf16.msra.mxu0 0
        %1411 = vmatpush.bf16.msra.mxu0 0
        %1412 = vmatpush.bf16.msra.mxu0 0
        %1413 = vmatpush.bf16.msra.mxu0 0
        %1414 = vmatpush.bf16.msra.mxu0 0
        %1415 = vmatpush.bf16.msra.mxu0 %v1350
        %1416 = vmatmul.bf16.gmra.mxu0 %v622
        %v1417 = vpop.f32.mrf.mxu0
        %v1418 = vadd.f32 %v1362, %v1417
        %v1419 = vpop.f32.mrf.mxu0
        %v1420 = vadd.f32 %v1364, %v1419
        %1421 = vdwg.mxu0
        %v1422 = vmul.f32 %v385, %v393
        %v1423 = vmul.f32 %v386, %v394
        %v1424 = vmul.f32 %v387, %v395
        %v1425 = vmul.f32 %v388, %v396
        %v1426 = vmul.f32 %v389, %v397
        %v1427 = vmul.f32 %v390, %v398
        %v1428 = vmul.f32 %v391, %v399
        %v1429 = vmul.f32 %v392, %v400
        %v1430 = vpack.c.bf16 %v1422, %v1422
        %v1431 = vpack.c.bf16 %v1423, %v1423
        %v1432 = vpack.c.bf16 %v1424, %v1424
        %v1433 = vpack.c.bf16 %v1425, %v1425
        %v1434 = vpack.c.bf16 %v1426, %v1426
        %v1435 = vpack.c.bf16 %v1427, %v1427
        %v1436 = vpack.c.bf16 %v1428, %v1428
        %v1437 = vpack.c.bf16 %v1429, %v1429
        %v1446 = vunpack.c.l.b16 %v1430
        %v1447 = vunpack.c.l.b16 %v1431
        %v1448 = vunpack.c.l.b16 %v1432
        %v1449 = vunpack.c.l.b16 %v1433
        %v1450 = vunpack.c.l.b16 %v1434
        %v1451 = vunpack.c.l.b16 %v1435
        %v1452 = vunpack.c.l.b16 %v1436
        %v1453 = vunpack.c.l.b16 %v1437
        %v1454 = vpack.c.b16 %v1447, %v1446
        %v1455 = vpack.c.b16 %v1449, %v1448
        %v1456 = vpack.c.b16 %v1451, %v1450
        %v1457 = vpack.c.b16 %v1453, %v1452
        %v1459 = vsel %vm443, %v1454, 0
        %v1462 = vsel %vm443, %v1455, 0
        %v1465 = vsel %vm443, %v1456, 0
        %v1468 = vsel %vm443, %v1457, 0
        %1470 = vmatpush.bf16.msra.mxu0 0
        %1471 = vmatpush.bf16.msra.mxu0 0
        %1472 = vmatpush.bf16.msra.mxu0 0
        %1473 = vmatpush.bf16.msra.mxu0 0
        %1474 = vmatpush.bf16.msra.mxu0 0
        %1475 = vmatpush.bf16.msra.mxu0 0
        %1476 = vmatpush.bf16.msra.mxu0 0
        %1477 = vmatpush.bf16.msra.mxu0 %v441
        %1478 = vmatmul.bf16.gmra.mxu0 %v1459
        %v1479 = vpop.f32.mrf.mxu0
        %v1480 = vadd.f32 0.0, %v1479
        %v1481 = vpop.f32.mrf.mxu0
        %v1482 = vadd.f32 0.0, %v1481
        %1483 = vmatmul.bf16.gmra.mxu0 %v1462
        %v1484 = vpop.f32.mrf.mxu0
        %v1485 = vadd.f32 0.0, %v1484
        %v1486 = vpop.f32.mrf.mxu0
        %v1487 = vadd.f32 0.0, %v1486
        %1488 = vmatmul.bf16.gmra.mxu0 %v1465
        %v1489 = vpop.f32.mrf.mxu0
        %v1490 = vadd.f32 0.0, %v1489
        %v1491 = vpop.f32.mrf.mxu0
        %v1492 = vadd.f32 0.0, %v1491
        %1493 = vmatmul.bf16.gmra.mxu0 %v1468
        %v1494 = vpop.f32.mrf.mxu0
        %v1495 = vadd.f32 0.0, %v1494
        %v1496 = vpop.f32.mrf.mxu0
        %v1497 = vadd.f32 0.0, %v1496
        %1498 = vdwg.mxu0
        %1499 = vmatpush.bf16.msra.mxu0 0
        %1500 = vmatpush.bf16.msra.mxu0 0
        %1501 = vmatpush.bf16.msra.mxu0 0
        %1502 = vmatpush.bf16.msra.mxu0 0
        %1503 = vmatpush.bf16.msra.mxu0 0
        %1504 = vmatpush.bf16.msra.mxu0 0
        %1505 = vmatpush.bf16.msra.mxu0 0
        %1506 = vmatpush.bf16.msra.mxu0 %v489
        %1507 = vmatmul.bf16.gmra.mxu0 %v1459
        %v1508 = vpop.f32.mrf.mxu0
        %v1509 = vadd.f32 %v1480, %v1508
        %v1510 = vpop.f32.mrf.mxu0
        %v1511 = vadd.f32 %v1482, %v1510
        %1512 = vmatmul.bf16.gmra.mxu0 %v1462
        %v1513 = vpop.f32.mrf.mxu0
        %v1514 = vadd.f32 %v1485, %v1513
        %v1515 = vpop.f32.mrf.mxu0
        %v1516 = vadd.f32 %v1487, %v1515
        %1517 = vmatmul.bf16.gmra.mxu0 %v1465
        %v1518 = vpop.f32.mrf.mxu0
        %v1519 = vadd.f32 %v1490, %v1518
        %v1520 = vpop.f32.mrf.mxu0
        %v1521 = vadd.f32 %v1492, %v1520
        %1522 = vmatmul.bf16.gmra.mxu0 %v1468
        %v1523 = vpop.f32.mrf.mxu0
        %v1524 = vadd.f32 %v1495, %v1523
        %v1525 = vpop.f32.mrf.mxu0
        %v1526 = vadd.f32 %v1497, %v1525
        %1527 = vdwg.mxu0
        %v1528 = vpack.c.bf16 %v1509, %v1509
        %v1529 = vpack.c.bf16 %v1511, %v1511
        %v1530 = vpack.c.bf16 %v1514, %v1514
        %v1531 = vpack.c.bf16 %v1516, %v1516
        %v1532 = vpack.c.bf16 %v1519, %v1519
        %v1533 = vpack.c.bf16 %v1521, %v1521
        %v1534 = vpack.c.bf16 %v1524, %v1524
        %v1535 = vpack.c.bf16 %v1526, %v1526
        %v1538 = vunpack.c.l.b16 %v1528
        %v1539 = vunpack.c.l.b16 %v1529
        %v1540 = vpack.c.b16 %v1539, %v1538
        %1542 = vmatpush.bf16.msra.mxu0 0
        %1543 = vmatpush.bf16.msra.mxu0 0
        %1544 = vmatpush.bf16.msra.mxu0 0
        %1545 = vmatpush.bf16.msra.mxu0 0
        %1546 = vmatpush.bf16.msra.mxu0 0
        %1547 = vmatpush.bf16.msra.mxu0 0
        %1548 = vmatpush.bf16.msra.mxu0 0
        %1549 = vmatpush.bf16.msra.mxu0 %v1540
        %1550 = vmatmul.bf16.gmra.mxu0 %v540
        %v1551 = vpop.f32.mrf.mxu0
        %v1552 = vadd.f32 0.0, %v1551
        %v1553 = vpop.f32.mrf.mxu0
        %v1554 = vadd.f32 0.0, %v1553
        %1555 = vdwg.mxu0
        %v1558 = vunpack.c.l.b16 %v1530
        %v1559 = vunpack.c.l.b16 %v1531
        %v1560 = vpack.c.b16 %v1559, %v1558
        %1562 = vmatpush.bf16.msra.mxu0 0
        %1563 = vmatpush.bf16.msra.mxu0 0
        %1564 = vmatpush.bf16.msra.mxu0 0
        %1565 = vmatpush.bf16.msra.mxu0 0
        %1566 = vmatpush.bf16.msra.mxu0 0
        %1567 = vmatpush.bf16.msra.mxu0 0
        %1568 = vmatpush.bf16.msra.mxu0 0
        %1569 = vmatpush.bf16.msra.mxu0 %v1560
        %1570 = vmatmul.bf16.gmra.mxu0 %v540
        %v1571 = vpop.f32.mrf.mxu0
        %v1572 = vadd.f32 0.0, %v1571
        %v1573 = vpop.f32.mrf.mxu0
        %v1574 = vadd.f32 0.0, %v1573
        %1575 = vdwg.mxu0
        %v1578 = vunpack.c.l.b16 %v1532
        %v1579 = vunpack.c.l.b16 %v1533
        %v1580 = vpack.c.b16 %v1579, %v1578
        %1582 = vmatpush.bf16.msra.mxu0 0
        %1583 = vmatpush.bf16.msra.mxu0 0
        %1584 = vmatpush.bf16.msra.mxu0 0
        %1585 = vmatpush.bf16.msra.mxu0 0
        %1586 = vmatpush.bf16.msra.mxu0 0
        %1587 = vmatpush.bf16.msra.mxu0 0
        %1588 = vmatpush.bf16.msra.mxu0 0
        %1589 = vmatpush.bf16.msra.mxu0 %v1580
        %1590 = vmatmul.bf16.gmra.mxu0 %v540
        %v1591 = vpop.f32.mrf.mxu0
        %v1592 = vadd.f32 0.0, %v1591
        %v1593 = vpop.f32.mrf.mxu0
        %v1594 = vadd.f32 0.0, %v1593
        %1595 = vdwg.mxu0
        %v1598 = vunpack.c.l.b16 %v1534
        %v1599 = vunpack.c.l.b16 %v1535
        %v1600 = vpack.c.b16 %v1599, %v1598
        %1602 = vmatpush.bf16.msra.mxu0 0
        %1603 = vmatpush.bf16.msra.mxu0 0
        %1604 = vmatpush.bf16.msra.mxu0 0
        %1605 = vmatpush.bf16.msra.mxu0 0
        %1606 = vmatpush.bf16.msra.mxu0 0
        %1607 = vmatpush.bf16.msra.mxu0 0
        %1608 = vmatpush.bf16.msra.mxu0 0
        %1609 = vmatpush.bf16.msra.mxu0 %v1600
        %1610 = vmatmul.bf16.gmra.mxu0 %v540
        %v1611 = vpop.f32.mrf.mxu0
        %v1612 = vadd.f32 0.0, %v1611
        %v1613 = vpop.f32.mrf.mxu0
        %v1614 = vadd.f32 0.0, %v1613
        %1615 = vdwg.mxu0
        %1616 = vmatpush.bf16.msra.mxu0 0
        %1617 = vmatpush.bf16.msra.mxu0 0
        %1618 = vmatpush.bf16.msra.mxu0 0
        %1619 = vmatpush.bf16.msra.mxu0 0
        %1620 = vmatpush.bf16.msra.mxu0 0
        %1621 = vmatpush.bf16.msra.mxu0 0
        %1622 = vmatpush.bf16.msra.mxu0 0
        %1623 = vmatpush.bf16.msra.mxu0 %v1540
        %1624 = vmatmul.bf16.gmra.mxu0 %v622
        %v1625 = vpop.f32.mrf.mxu0
        %v1626 = vadd.f32 %v1552, %v1625
        %v1627 = vpop.f32.mrf.mxu0
        %v1628 = vadd.f32 %v1554, %v1627
        %1629 = vdwg.mxu0
        %1630 = vmatpush.bf16.msra.mxu0 0
        %1631 = vmatpush.bf16.msra.mxu0 0
        %1632 = vmatpush.bf16.msra.mxu0 0
        %1633 = vmatpush.bf16.msra.mxu0 0
        %1634 = vmatpush.bf16.msra.mxu0 0
        %1635 = vmatpush.bf16.msra.mxu0 0
        %1636 = vmatpush.bf16.msra.mxu0 0
        %1637 = vmatpush.bf16.msra.mxu0 %v1560
        %1638 = vmatmul.bf16.gmra.mxu0 %v622
        %v1639 = vpop.f32.mrf.mxu0
        %v1640 = vadd.f32 %v1572, %v1639
        %v1641 = vpop.f32.mrf.mxu0
        %v1642 = vadd.f32 %v1574, %v1641
        %1643 = vdwg.mxu0
        %1644 = vmatpush.bf16.msra.mxu0 0
        %1645 = vmatpush.bf16.msra.mxu0 0
        %1646 = vmatpush.bf16.msra.mxu0 0
        %1647 = vmatpush.bf16.msra.mxu0 0
        %1648 = vmatpush.bf16.msra.mxu0 0
        %1649 = vmatpush.bf16.msra.mxu0 0
        %1650 = vmatpush.bf16.msra.mxu0 0
        %1651 = vmatpush.bf16.msra.mxu0 %v1580
        %1652 = vmatmul.bf16.gmra.mxu0 %v622
        %v1653 = vpop.f32.mrf.mxu0
        %v1654 = vadd.f32 %v1592, %v1653
        %v1655 = vpop.f32.mrf.mxu0
        %v1656 = vadd.f32 %v1594, %v1655
        %1657 = vdwg.mxu0
        %1658 = vmatpush.bf16.msra.mxu0 0
        %1659 = vmatpush.bf16.msra.mxu0 0
        %1660 = vmatpush.bf16.msra.mxu0 0
        %1661 = vmatpush.bf16.msra.mxu0 0
        %1662 = vmatpush.bf16.msra.mxu0 0
        %1663 = vmatpush.bf16.msra.mxu0 0
        %1664 = vmatpush.bf16.msra.mxu0 0
        %1665 = vmatpush.bf16.msra.mxu0 %v1600
        %1666 = vmatmul.bf16.gmra.mxu0 %v622
        %v1667 = vpop.f32.mrf.mxu0
        %v1668 = vadd.f32 %v1612, %v1667
        %v1669 = vpop.f32.mrf.mxu0
        %v1670 = vadd.f32 %v1614, %v1669
        %1671 = vdwg.mxu0
        %v1672 = vmul.f32 %v634, %v634
        %v1673 = vmul.f32 %v636, %v636
        %v1674 = vmul.f32 %v648, %v648
        %v1675 = vmul.f32 %v650, %v650
        %v1676 = vmul.f32 %v662, %v662
        %v1677 = vmul.f32 %v664, %v664
        %v1678 = vmul.f32 %v676, %v676
        %v1679 = vmul.f32 %v678, %v678
        %v1680 = vmul.f32 %v876, %v876
        %v1681 = vmul.f32 %v878, %v878
        %v1682 = vmul.f32 %v890, %v890
        %v1683 = vmul.f32 %v892, %v892
        %v1684 = vmul.f32 %v904, %v904
        %v1685 = vmul.f32 %v906, %v906
        %v1686 = vmul.f32 %v918, %v918
        %v1687 = vmul.f32 %v920, %v920
        %v1688 = vmul.f32 %v634, %v876
        %v1689 = vmul.f32 %v636, %v878
        %v1690 = vmul.f32 %v648, %v890
        %v1691 = vmul.f32 %v650, %v892
        %v1692 = vmul.f32 %v662, %v904
        %v1693 = vmul.f32 %v664, %v906
        %v1694 = vmul.f32 %v676, %v918
        %v1695 = vmul.f32 %v678, %v920
        %v1696 = vsub.f32 %v1126, %v1672
        %v1697 = vsub.f32 %v1128, %v1673
        %v1698 = vsub.f32 %v1140, %v1674
        %v1699 = vsub.f32 %v1142, %v1675
        %v1700 = vsub.f32 %v1154, %v1676
        %v1701 = vsub.f32 %v1156, %v1677
        %v1702 = vsub.f32 %v1168, %v1678
        %v1703 = vsub.f32 %v1170, %v1679
        %v1704 = vsub.f32 %v1376, %v1680
        %v1705 = vsub.f32 %v1378, %v1681
        %v1706 = vsub.f32 %v1390, %v1682
        %v1707 = vsub.f32 %v1392, %v1683
        %v1708 = vsub.f32 %v1404, %v1684
        %v1709 = vsub.f32 %v1406, %v1685
        %v1710 = vsub.f32 %v1418, %v1686
        %v1711 = vsub.f32 %v1420, %v1687
        %v1712 = vsub.f32 %v1626, %v1688
        %v1713 = vsub.f32 %v1628, %v1689
        %v1714 = vsub.f32 %v1640, %v1690
        %v1715 = vsub.f32 %v1642, %v1691
        %v1716 = vsub.f32 %v1654, %v1692
        %v1717 = vsub.f32 %v1656, %v1693
        %v1718 = vsub.f32 %v1668, %v1694
        %v1719 = vsub.f32 %v1670, %v1695
        %v1720 = vmul.f32 %v1688, 2.0
        %v1721 = vmul.f32 %v1689, 2.0
        %v1722 = vmul.f32 %v1690, 2.0
        %v1723 = vmul.f32 %v1691, 2.0
        %v1724 = vmul.f32 %v1692, 2.0
        %v1725 = vmul.f32 %v1693, 2.0
        %v1726 = vmul.f32 %v1694, 2.0
        %v1727 = vmul.f32 %v1695, 2.0
        %v1728 = vadd.f32 %v1720, 0.0001
        %v1729 = vadd.f32 %v1721, 0.0001
        %v1730 = vadd.f32 %v1722, 0.0001
        %v1731 = vadd.f32 %v1723, 0.0001
        %v1732 = vadd.f32 %v1724, 0.0001
        %v1733 = vadd.f32 %v1725, 0.0001
        %v1734 = vadd.f32 %v1726, 0.0001
        %v1735 = vadd.f32 %v1727, 0.0001
        %v1736 = vmul.f32 %v1712, 2.0
        %v1737 = vmul.f32 %v1713, 2.0
        %v1738 = vmul.f32 %v1714, 2.0
        %v1739 = vmul.f32 %v1715, 2.0
        %v1740 = vmul.f32 %v1716, 2.0
        %v1741 = vmul.f32 %v1717, 2.0
        %v1742 = vmul.f32 %v1718, 2.0
        %v1743 = vmul.f32 %v1719, 2.0
        %v1744 = vadd.f32 %v1736, 0.0009
        %v1745 = vadd.f32 %v1737, 0.0009
        %v1746 = vadd.f32 %v1738, 0.0009
        %v1747 = vadd.f32 %v1739, 0.0009
        %v1748 = vadd.f32 %v1740, 0.0009
        %v1749 = vadd.f32 %v1741, 0.0009
        %v1750 = vadd.f32 %v1742, 0.0009
        %v1751 = vadd.f32 %v1743, 0.0009
        %v1752 = vmul.f32 %v1728, %v1744
        %v1753 = vmul.f32 %v1729, %v1745
        %v1754 = vmul.f32 %v1730, %v1746
        %v1755 = vmul.f32 %v1731, %v1747
        %v1756 = vmul.f32 %v1732, %v1748
        %v1757 = vmul.f32 %v1733, %v1749
        %v1758 = vmul.f32 %v1734, %v1750
        %v1759 = vmul.f32 %v1735, %v1751
        %v1760 = vadd.f32 %v1672, %v1680
        %v1761 = vadd.f32 %v1673, %v1681
        %v1762 = vadd.f32 %v1674, %v1682
        %v1763 = vadd.f32 %v1675, %v1683
        %v1764 = vadd.f32 %v1676, %v1684
        %v1765 = vadd.f32 %v1677, %v1685
        %v1766 = vadd.f32 %v1678, %v1686
        %v1767 = vadd.f32 %v1679, %v1687
        %v1768 = vadd.f32 %v1760, 0.0001
        %v1769 = vadd.f32 %v1761, 0.0001
        %v1770 = vadd.f32 %v1762, 0.0001
        %v1771 = vadd.f32 %v1763, 0.0001
        %v1772 = vadd.f32 %v1764, 0.0001
        %v1773 = vadd.f32 %v1765, 0.0001
        %v1774 = vadd.f32 %v1766, 0.0001
        %v1775 = vadd.f32 %v1767, 0.0001
        %v1776 = vadd.f32 %v1696, %v1704
        %v1777 = vadd.f32 %v1697, %v1705
        %v1778 = vadd.f32 %v1698, %v1706
        %v1779 = vadd.f32 %v1699, %v1707
        %v1780 = vadd.f32 %v1700, %v1708
        %v1781 = vadd.f32 %v1701, %v1709
        %v1782 = vadd.f32 %v1702, %v1710
        %v1783 = vadd.f32 %v1703, %v1711
        %v1784 = vadd.f32 %v1776, 0.0009
        %v1785 = vadd.f32 %v1777, 0.0009
        %v1786 = vadd.f32 %v1778, 0.0009
        %v1787 = vadd.f32 %v1779, 0.0009
        %v1788 = vadd.f32 %v1780, 0.0009
        %v1789 = vadd.f32 %v1781, 0.0009
        %v1790 = vadd.f32 %v1782, 0.0009
        %v1791 = vadd.f32 %v1783, 0.0009
        %v1792 = vmul.f32 %v1768, %v1784
        %v1793 = vmul.f32 %v1769, %v1785
        %v1794 = vmul.f32 %v1770, %v1786
        %v1795 = vmul.f32 %v1771, %v1787
        %v1796 = vmul.f32 %v1772, %v1788
        %v1797 = vmul.f32 %v1773, %v1789
        %v1798 = vmul.f32 %v1774, %v1790
        %v1799 = vmul.f32 %v1775, %v1791
        %v1800 = vrcp.pop %v1792
        %v1801 = vrcp.pop %v1793
        %v1802 = vrcp.pop %v1794
        %v1803 = vrcp.pop %v1795
        %v1804 = vrcp.pop %v1796
        %v1805 = vrcp.pop %v1797
        %v1806 = vrcp.pop %v1798
        %v1807 = vrcp.pop %v1799
        %v1808 = vmul.f32 %v1792, %v1800
        %v1809 = vmul.f32 %v1793, %v1801
        %v1810 = vmul.f32 %v1794, %v1802
        %v1811 = vmul.f32 %v1795, %v1803
        %v1812 = vmul.f32 %v1796, %v1804
        %v1813 = vmul.f32 %v1797, %v1805
        %v1814 = vmul.f32 %v1798, %v1806
        %v1815 = vmul.f32 %v1799, %v1807
        %v1816 = vsub.f32 2.0, %v1808
        %v1817 = vsub.f32 2.0, %v1809
        %v1818 = vsub.f32 2.0, %v1810
        %v1819 = vsub.f32 2.0, %v1811
        %v1820 = vsub.f32 2.0, %v1812
        %v1821 = vsub.f32 2.0, %v1813
        %v1822 = vsub.f32 2.0, %v1814
        %v1823 = vsub.f32 2.0, %v1815
        %v1824 = vmul.f32 %v1800, %v1816
        %v1825 = vmul.f32 %v1801, %v1817
        %v1826 = vmul.f32 %v1802, %v1818
        %v1827 = vmul.f32 %v1803, %v1819
        %v1828 = vmul.f32 %v1804, %v1820
        %v1829 = vmul.f32 %v1805, %v1821
        %v1830 = vmul.f32 %v1806, %v1822
        %v1831 = vmul.f32 %v1807, %v1823
        %v1832 = vmul.f32 %v1752, %v1824
        %v1833 = vmul.f32 %v1753, %v1825
        %v1834 = vmul.f32 %v1754, %v1826
        %v1835 = vmul.f32 %v1755, %v1827
        %v1836 = vmul.f32 %v1756, %v1828
        %v1837 = vmul.f32 %v1757, %v1829
        %v1838 = vmul.f32 %v1758, %v1830
        %v1839 = vmul.f32 %v1759, %v1831
        %v1840 = vsel %vm443, %v1832, 0.0
        %1841 = vadd.xlane.f32.xlu0 %v1840
        %v1842 = vpop.xlane.xlu0 %1841
        %v1843 = vsel %vm443, %v1833, 0.0
        %1844 = vadd.xlane.f32.xlu0 %v1843
        %v1845 = vpop.xlane.xlu0 %1844
        %v1846 = vsel %vm443, %v1834, 0.0
        %1847 = vadd.xlane.f32.xlu0 %v1846
        %v1848 = vpop.xlane.xlu0 %1847
        %v1849 = vsel %vm443, %v1835, 0.0
        %1850 = vadd.xlane.f32.xlu0 %v1849
        %v1851 = vpop.xlane.xlu0 %1850
        %v1852 = vsel %vm443, %v1836, 0.0
        %1853 = vadd.xlane.f32.xlu0 %v1852
        %v1854 = vpop.xlane.xlu0 %1853
        %v1855 = vsel %vm443, %v1837, 0.0
        %1856 = vadd.xlane.f32.xlu0 %v1855
        %v1857 = vpop.xlane.xlu0 %1856
        %v1858 = vsel %vm443, %v1838, 0.0
        %1859 = vadd.xlane.f32.xlu0 %v1858
        %v1860 = vpop.xlane.xlu0 %1859
        %v1861 = vsel %vm443, %v1839, 0.0
        %1862 = vadd.xlane.f32.xlu0 %v1861
        %v1863 = vpop.xlane.xlu0 %1862
        %v1872 = vlaneseq
        %v1873 = vand.u32 %v1872, 127
        %v1874 = vperm.slane %v1842, %v1873
        %v1875 = vadd.s32 %v1873, 4294967288
        %v1876 = vperm.slane %v1845, %v1875
        %vm1877 = vcmask 130112
        %v1878 = vsel %vm1877, %v1876, %v1874
        %v1879 = vperm.slane %v1848, %v1873
        %v1880 = vperm.slane %v1851, %v1875
        %v1881 = vsel %vm1877, %v1880, %v1879
        %v1882 = vperm.slane %v1854, %v1873
        %v1883 = vperm.slane %v1857, %v1875
        %v1884 = vsel %vm1877, %v1883, %v1882
        %v1885 = vperm.slane %v1860, %v1873
        %v1886 = vperm.slane %v1863, %v1875
        %v1887 = vsel %vm1877, %v1886, %v1885
        %vm1888 = vcmask 1041409
        %v1889 = vsel %vm1888, %v1881, %v1878
        %vm1890 = vcmask 1042434
        %v1891 = vsel %vm1890, %v1884, %v1889
        %vm1892 = vcmask 1043459
        %v1893 = vsel %vm1892, %v1887, %v1891
        %vm1895 = vcmask 125952
        %v1896 = vsel %vm1895, %v1893, 0.0
        %1897 = vadd.xlane.f32.xlu0 %v1896
        %v1898 = vpop.xlane.xlu0 %1897
        %vm1899 = vcmask 3072
        %1900 = vst.msk [vmem:[%s383] sm:$0xf] %vm1899, %v1898
        %p1901 = scmp.lt.s32.totalorder %s25, 1
        %s1902 = scalar_select %p1901, %s25, 1
        %s1903 = smul.addr %s1902, 4
        %s1904 = scalar_lea.vmem %s6, %s1903
        // Predicated region
        $region69: #{tpu_custom_call.1} parent=43 // pred_check
          %p1905 = pneg %p179
        $region70: #{tpu_custom_call.1} parent=43 // pred_check_branch
          %1907 = sbr.rel (%p1905) target = $region72
        $region71: #{tpu_custom_call.1} parent=43 // pred_region
          _
        $region72: #{tpu_custom_call.1} parent=43 // pred_fallthru
          _
      $region44: #{tpu_custom_call.1} parent=5 // pred_fallthru
        _
      %p1908 = scmp.le.s32.totalorder 2, %s20
      // Predicated region
      $region73: #{tpu_custom_call.1} parent=5 // pred_check
        %p1909 = pneg %p1908
      $region74: #{tpu_custom_call.1} parent=5 // pred_check_branch
        %1911 = sbr.rel (%p1909) target = $region76
      $region75: #{tpu_custom_call.1} parent=5 // pred_region
        %s1912 = ssub.s32 %s20, 2
        // Predicated region
        $region77: #{tpu_custom_call.1} parent=75 // pred_check
          %p1913 = pneg %p185
        $region78: #{tpu_custom_call.1} parent=75 // pred_check_branch
          %1915 = sbr.rel (%p1913) target = $region80
        $region79: #{tpu_custom_call.1} parent=75 // pred_region
          %p1916 = scmp.lt.s32.totalorder %s26, 1
          %s1917 = scalar_select %p1916, %s26, 1
          %s1918 = smul.addr %s1917, 4
          %s1919 = scalar_lea.vmem %s6, %s1918
        $region80: #{tpu_custom_call.1} parent=75 // pred_fallthru
          _
      $region76: #{tpu_custom_call.1} parent=5 // pred_fallthru
        _
    $region6: #{tpu_custom_call.1} parent=1 // loop_footer
      %s24 = sadd.s32 1, %s20
    $region7: #{tpu_custom_call.1} parent=1 // loop_footer_branch
      %19 = sbr.rel target = $region3
    $region8: #{tpu_custom_call.1} parent=1 // loop_exit
      _
    %1920 = vsyncpa [#allocation3], 1
    %s1921 = scalar_lea.sflag [#allocation3], 1
    %1922 = vsyncpa %s1921, 1
    %1923 = vsyncpa [#allocation5], 1
    %s1924 = scalar_lea.sflag [#allocation5], 1
    %1925 = vsyncpa %s1924, 1
    %1926 = vsyncpa [#allocation8], 1
    %1927 = vsyncpa [#allocation11], 1

</llo_original>
